<compile_context>
chip_gen: v7x
topology: tpu7x:2x2x1
jax: 0.10.0
libtpu: 0.0.40
codegen_flags: <defaults>
</compile_context>

<pallas_src>
import functools
import math

import numpy as np
import jax
import jax.numpy as jnp
from jax.experimental import pallas as pl
from jax.experimental.pallas import tpu as pltpu

_LANE = 128                        # vreg lane width
_TARGET_BLOCK_BYTES = 2 << 20      # ~2 MiB payload per array per grid step
_INTERM_BLOCK_BYTES = 4 << 20      # cap on the lane-padded transpose intermediate
_HARD_BLOCK_BYTES = 4 << 20        # cap for unavoidable full-extent blocks
_VMEM_LIMIT_BYTES = 32 << 20       # raise v5e's 16 MiB scoped default (safe on v6e/v7x)
_TINY_BYPASS_BYTES = 256 << 10     # below this, XLA's native copy wins


# ---------------------------------------------------------------------------
# Kernels
# ---------------------------------------------------------------------------
def _transpose_kernel(x_ref, o_ref):
    # (tB, tC, tL) -> (tB, tL, tC)
    o_ref[...] = jnp.transpose(x_ref[...], (0, 2, 1))


def _packed_transpose_kernel(x_ref, o_ref):
    # (tB, C, tL) -> (tB, tL // g, g * C).  Transpose, then fold g consecutive
    # L rows into the lane dim (row-major reshape) so the output block -- and
    # its HBM DMA -- is lane-dense even though C < 128.
    t = jnp.transpose(x_ref[...], (0, 2, 1))          # (tB, tL, C)
    o_ref[...] = t.reshape(o_ref.shape)               # (tB, tL // g, g * C)


# ---------------------------------------------------------------------------
# Tile planning helpers
# ---------------------------------------------------------------------------
def _sublane(dtype):
    # Native sublane packing multiple: 8 (32-bit), 16 (bf16/f16), 32 (int8/fp8).
    return 8 * max(1, 4 // jnp.dtype(dtype).itemsize)


def _round_up(n, m):
    return ((n + m - 1) // m) * m


def _largest_divisor(n, multiple_of, cap):
    """Largest divisor of n that is a multiple of `multiple_of` and <= cap."""
    if n % multiple_of != 0:
        return None
    q = n // multiple_of
    for k in range(q, 0, -1):
        if q % k == 0 and k * multiple_of <= cap:
            return k * multiple_of
    return None


def _pick_batch_tile(B, cap, other_steps):
    """Batch-block size: fill the byte budget, but keep >= 2 grid steps when
    possible so both TensorCores on a v7x megacore get work."""
    cap = max(1, cap)
    if other_steps <= 1:
        cap = min(cap, max(1, B // 2))
    return _largest_divisor(B, 1, cap) or 1


# ---------------------------------------------------------------------------
# pallas_call builders (cached per static configuration)
# ---------------------------------------------------------------------------
@functools.lru_cache(maxsize=None)
def _build_unpacked(B, C, L, dtype_name, tB, tC, tL):
    dtype = jnp.dtype(dtype_name)
    grid = (B // tB, C // tC, L // tL)
    return pl.pallas_call(
        _transpose_kernel,
        out_shape=jax.ShapeDtypeStruct((B, L, C), dtype),
        grid_spec=pltpu.PrefetchScalarGridSpec(
            num_scalar_prefetch=0,
            grid=grid,
            in_specs=[pl.BlockSpec((tB, tC, tL), lambda b, c, l: (b, c, l))],
            out_specs=pl.BlockSpec((tB, tL, tC), lambda b, c, l: (b, l, c)),
        ),
        compiler_params=pltpu.CompilerParams(
            dimension_semantics=("parallel", "parallel", "parallel"),
            vmem_limit_bytes=_VMEM_LIMIT_BYTES),
    )


@functools.lru_cache(maxsize=None)
def _build_packed(B, C, L, dtype_name, tB, tL, g):
    dtype = jnp.dtype(dtype_name)
    grid = (B // tB, L // tL)
    gc = g * C
    return pl.pallas_call(
        _packed_transpose_kernel,
        out_shape=jax.ShapeDtypeStruct((B, L // g, gc), dtype),
        grid_spec=pltpu.PrefetchScalarGridSpec(
            num_scalar_prefetch=0,
            grid=grid,
            in_specs=[pl.BlockSpec((tB, C, tL), lambda b, l: (b, 0, l))],
            out_specs=pl.BlockSpec((tB, tL // g, gc), lambda b, l: (b, l, 0)),
        ),
        compiler_params=pltpu.CompilerParams(
            dimension_semantics=("parallel", "parallel"),
            vmem_limit_bytes=_VMEM_LIMIT_BYTES),
    )


# Configurations whose lane-dense relayout Mosaic refused to lower.
_PACKED_UNSUPPORTED = set()


# ---------------------------------------------------------------------------
# Shape-dependent planning + dispatch
# ---------------------------------------------------------------------------
def _permute_small_c(x, B, C, L, item, subl):
    """C < 128: full-C blocks, lane-dense packed output when possible."""
    dtype_name = x.dtype.name

    # --- lane-dense packed layout: fold g consecutive L rows into the lanes ---
    g = _LANE // math.gcd(C, _LANE)          # smallest g with (g*C) % 128 == 0
    mult = max(_LANE, subl * g)              # L-tile granularity for packing
    padded_c = _round_up(C, subl)            # input block sublane padding
    cap_l = max(mult, min(_TARGET_BLOCK_BYTES // (padded_c * item),
                          _INTERM_BLOCK_BYTES // (_LANE * item)))
    tL = _largest_divisor(L, mult, cap_l)
    if (tL is None and L % g == 0
            and padded_c * L * item <= _HARD_BLOCK_BYTES
            and _LANE * L * item <= _INTERM_BLOCK_BYTES):
        tL = L                               # full-extent L block is always legal
    if tL is not None:
        cap_b = min(_TARGET_BLOCK_BYTES // (padded_c * tL * item),
                    _INTERM_BLOCK_BYTES // (_LANE * tL * item))
        tB = _pick_batch_tile(B, cap_b, L // tL)
        key = (B, C, L, dtype_name, tB, tL, g)
        if key not in _PACKED_UNSUPPORTED:
            try:
                out = _build_packed(*key)(x)
                return out.reshape(B, L, C)  # free row-major un-fold
            except Exception:                # Mosaic can't lower this relayout
                _PACKED_UNSUPPORTED.add(key)

    # --- fallback: plain (tL, C) output blocks (masked stores, lane-padded) ---
    cap_l = max(_LANE, _TARGET_BLOCK_BYTES // (_LANE * item))
    tL = _largest_divisor(L, _LANE, cap_l)
    if tL is None:
        if _LANE * L * item > _HARD_BLOCK_BYTES:
            return None
        tL = L
    cap_b = _TARGET_BLOCK_BYTES // (_LANE * tL * item)   # budget the padded out block
    tB = _pick_batch_tile(B, cap_b, L // tL)
    return _build_unpacked(B, C, L, dtype_name, tB, C, tL)(x)


def _permute_large_c(x, B, C, L, item):
    """C >= 128: output is already lane-dense; tile C (and L, B) by bytes."""
    dtype_name = x.dtype.name
    if C % _LANE == 0:
        cap_c = max(_LANE, _TARGET_BLOCK_BYTES // (_LANE * item))
        tC = _largest_divisor(C, _LANE, cap_c)
    else:
        if C * _LANE * item > _HARD_BLOCK_BYTES:
            return None
        tC = C                               # full extent is always a legal block dim
    cap_l = max(_LANE, _TARGET_BLOCK_BYTES // (tC * item))
    tL = _largest_divisor(L, _LANE, cap_l)
    if tL is None:
        if tC * L * item > _HARD_BLOCK_BYTES:
            return None
        tL = L
    cap_b = _TARGET_BLOCK_BYTES // (tC * tL * item)
    tB = _pick_batch_tile(B, cap_b, (C // tC) * (L // tL))
    return _build_unpacked(B, C, L, dtype_name, tB, tC, tL)(x)


def permute_021(x):
    """Pallas equivalent of `x.permute(0, 2, 1)` on a (B, C, L) array."""
    assert x.ndim == 3, "Permute(0, 2, 1) expects a rank-3 input"
    B, C, L = x.shape
    item = x.dtype.itemsize

    if B * C * L * item < _TINY_BYPASS_BYTES:
        # A couple of vregs of data: kernel-launch + grid overhead is pure loss
        # versus XLA's native copy.
        return jnp.transpose(x, (0, 2, 1))

    if C < _LANE:
        out = _permute_small_c(x, B, C, L, item, _sublane(x.dtype))
    else:
        out = _permute_large_c(x, B, C, L, item)

    if out is None:
        # TODO(synk): shapes with no lane-aligned tiling whose full-extent block
        # would blow VMEM fall back to XLA's native transpose.
        return jnp.transpose(x, (0, 2, 1))
    return out


# ---------------------------------------------------------------------------
# Self-test
# ---------------------------------------------------------------------------
if __name__ == "__main__":
    key = jax.random.PRNGKey(0)
    ks = jax.random.split(key, 4)

    def _check(x):
        out = jax.block_until_ready(permute_021(x))
        ref = jnp.transpose(x, (0, 2, 1))
        assert out.shape == ref.shape, (out.shape, ref.shape)
        np.testing.assert_array_equal(np.asarray(out), np.asarray(ref))

    # 1) tiny module-typical shape -> XLA bypass path
    _check(jax.random.normal(ks[0], (2, 4, 16), jnp.float32))
    # 2) small-C, lane-packed + batch-blocked pipelined path (C=8 -> g=16)
    _check(jax.random.normal(ks[1], (4, 8, 4096), jnp.float32))
    # 3) small-C, lane-packed path with multi-step L grid (C=4 -> g=32)
    _check(jax.random.normal(ks[2], (2, 4, 16384), jnp.float32))
    # 4) large-C path (C >= 128: already lane-dense, no packing needed)
    _check(jax.random.normal(ks[3], (2, 256, 512), jnp.float32))

    print("KERNEL_OK")
</pallas_src>

<mosaic_0001>
module attributes {stable_mosaic.version = 11 : i64} {
  func.func @_packed_transpose_kernel(%arg0: i32, %arg1: i32, %arg2: memref<2x8x4096xf32, #tpu.memory_space<vmem>>, %arg3: memref<2x256x128xf32, #tpu.memory_space<vmem>>) attributes {dimension_semantics = [#tpu.dimension_semantics<parallel>, #tpu.dimension_semantics<parallel>], iteration_bounds = array<i64: 2, 1>, scalar_prefetch = 0 : i64, scratch_operands = 0 : i64, tpu.core_type = #tpu.core_type<tc>, window_params = [{transform_indices = @transform_0, window_bounds = array<i64: 2, 8, 4096>}, {transform_indices = @transform_1, window_bounds = array<i64: 2, 256, 128>}]} {
    %c0 = arith.constant 0 : index
    %c0_0 = arith.constant 0 : index
    %c0_1 = arith.constant 0 : index
    %0 = vector.load %arg2[%c0, %c0_0, %c0_1] : memref<2x8x4096xf32, #tpu.memory_space<vmem>>, vector<2x8x4096xf32>
    %1 = tpu.transpose %0, [0, 2, 1] : vector<2x8x4096xf32> -> vector<2x4096x8xf32>
    %2 = vector.shape_cast %1 : vector<2x4096x8xf32> to vector<2x256x128xf32>
    %c0_2 = arith.constant 0 : index
    %c0_3 = arith.constant 0 : index
    %c0_4 = arith.constant 0 : index
    %3 = vector.load %arg3[%c0_2, %c0_3, %c0_4] : memref<2x256x128xf32, #tpu.memory_space<vmem>>, vector<2x256x128xf32>
    tpu.vector_store %arg3[%c0_2, %c0_3, %c0_4], %2 {strides = array<i32>} : memref<2x256x128xf32, #tpu.memory_space<vmem>>, vector<2x256x128xf32>,
    return
  }
  func.func @transform_0(%arg0: i32, %arg1: i32) -> (i32, i32, i32) {
    %c0_i32 = arith.constant 0 : i32
    %c0_i32_0 = arith.constant 0 : i32
    return %arg0, %c0_i32, %arg1 : i32, i32, i32
  }
  func.func @transform_1(%arg0: i32, %arg1: i32) -> (i32, i32, i32) {
    %c0_i32 = arith.constant 0 : i32
    %c0_i32_0 = arith.constant 0 : i32
    return %arg0, %arg1, %c0_i32 : i32, i32, i32
  }
}

module attributes {stable_mosaic.version = 11 : i64} {
  func.func @_transpose_kernel(%arg0: i32, %arg1: i32, %arg2: i32, %arg3: memref<1x8x4096xf32, #tpu.memory_space<vmem>>, %arg4: memref<1x4096x8xf32, #tpu.memory_space<vmem>>) attributes {dimension_semantics = [#tpu.dimension_semantics<parallel>, #tpu.dimension_semantics<parallel>, #tpu.dimension_semantics<parallel>], iteration_bounds = array<i64: 4, 1, 1>, scalar_prefetch = 0 : i64, scratch_operands = 0 : i64, tpu.core_type = #tpu.core_type<tc>, window_params = [{transform_indices = @transform_0, window_bounds = array<i64: 1, 8, 4096>}, {transform_indices = @transform_1, window_bounds = array<i64: 1, 4096, 8>}]} {
    %c0 = arith.constant 0 : index
    %c0_0 = arith.constant 0 : index
    %c0_1 = arith.constant 0 : index
    %0 = vector.load %arg3[%c0, %c0_0, %c0_1] : memref<1x8x4096xf32, #tpu.memory_space<vmem>>, vector<1x8x4096xf32>
    %1 = tpu.transpose %0, [0, 2, 1] : vector<1x8x4096xf32> -> vector<1x4096x8xf32>
    %c0_2 = arith.constant 0 : index
    %c0_3 = arith.constant 0 : index
    %c0_4 = arith.constant 0 : index
    %2 = vector.load %arg4[%c0_2, %c0_3, %c0_4] : memref<1x4096x8xf32, #tpu.memory_space<vmem>>, vector<1x4096x8xf32>
    tpu.vector_store %arg4[%c0_2, %c0_3, %c0_4], %1 {strides = array<i32>} : memref<1x4096x8xf32, #tpu.memory_space<vmem>>, vector<1x4096x8xf32>,
    return
  }
  func.func @transform_0(%arg0: i32, %arg1: i32, %arg2: i32) -> (i32, i32, i32) {
    %c0_i32 = arith.constant 0 : i32
    return %arg0, %arg1, %arg2 : i32, i32, i32
  }
  func.func @transform_1(%arg0: i32, %arg1: i32, %arg2: i32) -> (i32, i32, i32) {
    %c0_i32 = arith.constant 0 : i32
    return %arg0, %arg2, %arg1 : i32, i32, i32
  }
}

</mosaic_0001>

<llo_original>
// kernel: tpu_custom_call.1
$region0: #{tpu_custom_call.1}
  #allocation0 [shape = 'u32[]', space=smem, size = 0x4, offset = 0x4, fixed_abs, tag = 'smem constant byte address 0x4 - core index']
  #allocation1 [shape = 'u32[144,128]{1,0:T(1,128)}', space=vmem, size = 0x12000, scoped, tag = 'internal scratch']
  %s0 = inlined_call_operand.hbm [shape: f32[4,8,4096], index: 0, kind: input, shape index: {}]
  %s1 = inlined_call_operand.vmem [shape: f32[4,4096,8], index: 1, kind: output, shape index: {}]
  %s2 = sld [smem:[#allocation0]]
  $region41: #{tpu_custom_call.1} parent=0
    _
  %s4 = ssub.s32 1, %s2
  %s5 = scalar_select 0, %s4, %s2
  $region1: #{tpu_custom_call.1} parent=0
    #allocation2 [shape = 'u8[262144]{0}', space=vmem, size = 0x40000, scoped, tag = 'input window, operand 0']
    #allocation3 [shape = 's32[2]{0}', space=sflag, size = 0x8, scoped, tag = 'scoped memory for tpu_custom_call.1']
    %6 = vsyncpa [#allocation3], 0
    %s7 = scalar_lea.sflag [#allocation3], 1
    %8 = vsyncpa %s7, 0
    loop: start=0, step=1, limit=6
    $region2: #{tpu_custom_call.1} parent=1 // loop_pre_header
      _
    $region3: #{tpu_custom_call.1} parent=1 // loop_header
      %s10 = sphi 0, %s14
      %p11 = scmp.ge.s32.totalorder %s10, 6
      %s17 = sphi 0, %s36
      %s18 = sphi 0, %s32
      %s19 = sphi 0, %s28
      %s20 = sphi 0, %s17
      %s21 = sphi 0, %s18
      %s22 = sphi 0, %s19
      %s23 = sphi 0, %s20
      %s24 = sphi 0, %s21
      %s25 = sphi 0, %s22
      %s43 = sphi 0, %s45
      %s46 = sphi 0, %s43
      %s47 = sphi 0, %s46
      %s63 = sphi 0, %s47
      %s73 = sphi 0, %s75
      %s76 = sphi 0, %s73
      %s77 = sphi 0, %s76
      %s93 = sphi 0, %s77
    $region4: #{tpu_custom_call.1} parent=1 // loop_header_branch
      %13 = sbr.rel (%p11) target = $region8
    $region5: #{tpu_custom_call.1} parent=1 // loop_body
      %s15 = ssub.s32 %s10, 1
      %s16 = ssub.s32 %s10, 2
      %s26 = sadd.s32 1, %s19
      %p27 = scmp.ge.s32.totalorder %s26, 1
      %s28 = scalar_select %p27, 0, %s26
      %s29 = sadd.s32 1, %s18
      %s30 = scalar_select %p27, %s29, %s18
      %p31 = scmp.ge.s32.totalorder %s30, 1
      %s32 = scalar_select %p31, 0, %s30
      %s33 = sadd.s32 1, %s17
      %s34 = scalar_select %p31, %s33, %s17
      %p35 = scmp.ge.s32.totalorder %s34, 4
      %s36 = scalar_select %p35, 0, %s34
      %s37 = ssub.s32 %s17, %s36
      %s38 = ssub.s32 %s18, %s32
      %s39 = sor.u32 %s37, %s38
      %s40 = ssub.s32 %s19, %s28
      %s41 = sor.u32 %s39, %s40
      %p42 = scmp.eq.s32.totalorder %s41, 0
      %s44 = sadd.s32 %s43, 1
      %s45 = scalar_select %p42, %s43, %s44
      %p48 = pneg %p42
      %p49 = scmp.eq.s32.totalorder %s10, 3
      %p50 = por %p48, %p49
      %p51 = scmp.ne.s32.totalorder %s43, %s46
      %p52 = scmp.eq.s32.totalorder %s10, 0
      %p53 = por %p51, %p52
      %p54 = scmp.ne.s32.totalorder %s43, %s46
      %p55 = scmp.eq.s32.totalorder %s15, 3
      %p56 = por %p54, %p55
      %p57 = scmp.ne.s32.totalorder %s46, %s47
      %p58 = scmp.eq.s32.totalorder %s15, 0
      %p59 = por %p57, %p58
      %p60 = scmp.ne.s32.totalorder %s46, %s47
      %p61 = scmp.eq.s32.totalorder %s16, 3
      %p62 = por %p60, %p61
      %p64 = scmp.ne.s32.totalorder %s47, %s63
      %p65 = scmp.eq.s32.totalorder %s16, 0
      %p66 = por %p64, %p65
      %s67 = ssub.s32 %s17, %s36
      %s68 = ssub.s32 %s19, %s28
      %s69 = sor.u32 %s67, %s68
      %s70 = ssub.s32 %s18, %s32
      %s71 = sor.u32 %s69, %s70
      %p72 = scmp.eq.s32.totalorder %s71, 0
      %s74 = sadd.s32 %s73, 1
      %s75 = scalar_select %p72, %s73, %s74
      %p78 = pneg %p72
      %p79 = scmp.eq.s32.totalorder %s10, 3
      %p80 = por %p78, %p79
      %p81 = scmp.ne.s32.totalorder %s73, %s76
      %p82 = scmp.eq.s32.totalorder %s10, 0
      %p83 = por %p81, %p82
      %p84 = scmp.ne.s32.totalorder %s73, %s76
      %p85 = scmp.eq.s32.totalorder %s15, 3
      %p86 = por %p84, %p85
      %p87 = scmp.ne.s32.totalorder %s76, %s77
      %p88 = scmp.eq.s32.totalorder %s15, 0
      %p89 = por %p87, %p88
      %p90 = scmp.ne.s32.totalorder %s76, %s77
      %p91 = scmp.eq.s32.totalorder %s16, 3
      %p92 = por %p90, %p91
      %p94 = scmp.ne.s32.totalorder %s77, %s93
      %p95 = scmp.eq.s32.totalorder %s16, 0
      %p96 = por %p94, %p95
      %p97 = scmp.le.s32.totalorder 1, %s10
      %p98 = scmp.lt.s32.totalorder %s10, 5
      %p99 = pnand %p97, %p98
      %p100 = pneg %p99
      // Predicated region
      $region9: #{tpu_custom_call.1} parent=5 // pred_check
        _
      $region10: #{tpu_custom_call.1} parent=5 // pred_check_branch
        %102 = sbr.rel (%p99) target = $region12
      $region11: #{tpu_custom_call.1} parent=5 // pred_region
        %s103 = ssub.s32 %s10, 1
      $region12: #{tpu_custom_call.1} parent=5 // pred_fallthru
        _
      %p104 = scmp.lt.s32.totalorder %s10, 4
      // Predicated region
      $region13: #{tpu_custom_call.1} parent=5 // pred_check
        %p105 = pneg %p104
      $region14: #{tpu_custom_call.1} parent=5 // pred_check_branch
        %107 = sbr.rel (%p105) target = $region16
      $region15: #{tpu_custom_call.1} parent=5 // pred_region
        // Predicated region
        $region17: #{tpu_custom_call.1} parent=15 // pred_check
          %p108 = pneg %p53
        $region18: #{tpu_custom_call.1} parent=15 // pred_check_branch
          %110 = sbr.rel (%p108) target = $region20
        $region19: #{tpu_custom_call.1} parent=15 // pred_region
          %s111 = sand.u32 %s43, 1
          %s112 = scalar_lea.sflag [#allocation3], %s111
          %s113 = sand.u32 %s43, 1
          %s114 = smul.addr %s113, 256
          %s115 = scalar_lea.vmem [#allocation2], %s114
          %s116 = smul.u32 32, %s19
          %s118 = ssub.s32 4096, 4096
          %119 = vsyncadd %s112, %s118
          %s120 = smul.addr %s18, 32
          %s121 = sadd.s32 %s116, %s120
          %s122 = smul.addr %s17, 32
          %s123 = sadd.s32 %s121, %s122
          %s124 = smul.addr %s123, 128
          %s125 = scalar_lea.hbm %s0, %s124
          %s127 = sshll.u32 %s115, 4
          %s128 = int_to_ptr.vmem [resolvable:$true] %s127
          %130 = dma.hbm_to_vmem [thread:$0]  %s125, 4096, %s128, %s112
        $region20: #{tpu_custom_call.1} parent=15 // pred_fallthru
          _
      $region16: #{tpu_custom_call.1} parent=5 // pred_fallthru
        _
      %p131 = scmp.le.s32.totalorder 1, %s10
      %p132 = scmp.lt.s32.totalorder %s10, 5
      %p133 = pnand %p131, %p132
      %p134 = pneg %p133
      // Predicated region
      $region21: #{tpu_custom_call.1} parent=5 // pred_check
        _
      $region22: #{tpu_custom_call.1} parent=5 // pred_check_branch
        %136 = sbr.rel (%p133) target = $region24
      $region23: #{tpu_custom_call.1} parent=5 // pred_region
        %s137 = ssub.s32 %s10, 1
        %s138 = sand.u32 %s46, 1
        %s139 = scalar_lea.sflag [#allocation3], %s138
        %s140 = sand.u32 %s46, 1
        %s141 = smul.addr %s140, 256
        %s142 = scalar_lea.vmem [#allocation2], %s141
        // Predicated region
        $region25: #{tpu_custom_call.1} parent=23 // pred_check
          %p143 = pneg %p59
        $region26: #{tpu_custom_call.1} parent=23 // pred_check_branch
          %145 = sbr.rel (%p143) target = $region28
        $region27: #{tpu_custom_call.1} parent=23 // pred_region
          %146 = dma.done %s139, 4096
        $region28: #{tpu_custom_call.1} parent=23 // pred_fallthru
          _
        %s147 = sand.u32 %s46, 1
        %s148 = scalar_lea.sflag [#allocation3], %s147
        %s149 = sand.u32 %s46, 1
        %s150 = smul.addr %s149, 256
        %s151 = scalar_lea.vmem [#allocation2], %s150
        %p152 = pneg %p59
        %p153 = pneg %p56
        %p154 = pneg %p89
        %p155 = pneg %p86
        %s156 = smul.u32 512, %s22
        %p157 = scmp.lt.s32.totalorder %s20, 3
        %s158 = scalar_select %p157, %s20, 3
        %p159 = scmp.lt.s32.totalorder %s156, 511
        %s160 = scalar_select %p159, %s156, 511
        %p161 = scmp.lt.s32.totalorder %s21, 0
        %s162 = scalar_select %p161, %s21, 0
        %s163 = sadd.s32 %s162, %s160
        %s164 = smul.addr %s158, 512
        %s165 = sadd.s32 %s163, %s164
        %s166 = smul.addr %s165, 8
        %s167 = scalar_lea.vmem %s1, %s166
        %s168 = smul.u32 32, %s22
        %s169 = smul.u32 512, %s22
        %p170 = scmp.lt.s32.totalorder %s20, 3
        %s171 = scalar_select %p170, %s20, 3
        %p172 = scmp.lt.s32.totalorder %s169, 511
        %s173 = scalar_select %p172, %s169, 511
        %p174 = scmp.lt.s32.totalorder %s21, 0
        %s175 = scalar_select %p174, %s21, 0
        %s176 = sadd.s32 %s175, %s173
        %s177 = smul.addr %s171, 512
        %s178 = sadd.s32 %s176, %s177
        %s179 = smul.addr %s178, 8
        %s180 = scalar_lea.vmem %s1, %s179
        %s181 = smul.u32 512, %s22
        %v182 = vld [vmem:[%s142] sm:$0xff]
        %v183 = vld [vmem:[%s142 + $0x8] sm:$0xff]
        %v184 = vld [vmem:[%s142 + $0x10] sm:$0xff]
        %v185 = vld [vmem:[%s142 + $0x18] sm:$0xff]
        %v186 = vld [vmem:[%s142 + $0x20] sm:$0xff]
        %v187 = vld [vmem:[%s142 + $0x28] sm:$0xff]
        %v188 = vld [vmem:[%s142 + $0x30] sm:$0xff]
        %v189 = vld [vmem:[%s142 + $0x38] sm:$0xff]
        %v190 = vld [vmem:[%s142 + $0x40] sm:$0xff]
        %v191 = vld [vmem:[%s142 + $0x48] sm:$0xff]
        %v192 = vld [vmem:[%s142 + $0x50] sm:$0xff]
        %v193 = vld [vmem:[%s142 + $0x58] sm:$0xff]
        %v194 = vld [vmem:[%s142 + $0x60] sm:$0xff]
        %v195 = vld [vmem:[%s142 + $0x68] sm:$0xff]
        %v196 = vld [vmem:[%s142 + $0x70] sm:$0xff]
        %v197 = vld [vmem:[%s142 + $0x78] sm:$0xff]
        %v198 = vld [vmem:[%s142 + $0x80] sm:$0xff]
        %v199 = vld [vmem:[%s142 + $0x88] sm:$0xff]
        %v200 = vld [vmem:[%s142 + $0x90] sm:$0xff]
        %v201 = vld [vmem:[%s142 + $0x98] sm:$0xff]
        %v202 = vld [vmem:[%s142 + $0xa0] sm:$0xff]
        %v203 = vld [vmem:[%s142 + $0xa8] sm:$0xff]
        %v204 = vld [vmem:[%s142 + $0xb0] sm:$0xff]
        %v205 = vld [vmem:[%s142 + $0xb8] sm:$0xff]
        %v206 = vld [vmem:[%s142 + $0xc0] sm:$0xff]
        %v207 = vld [vmem:[%s142 + $0xc8] sm:$0xff]
        %v208 = vld [vmem:[%s142 + $0xd0] sm:$0xff]
        %v209 = vld [vmem:[%s142 + $0xd8] sm:$0xff]
        %v210 = vld [vmem:[%s142 + $0xe0] sm:$0xff]
        %v211 = vld [vmem:[%s142 + $0xe8] sm:$0xff]
        %v212 = vld [vmem:[%s142 + $0xf0] sm:$0xff]
        %v213 = vld [vmem:[%s142 + $0xf8] sm:$0xff]
        %214 = vxpose.xlu0.b32.start [1/16] %v182, 128
        %215 = vxpose.xlu0.b32.cont [2/16] 0.0, 128
        %216 = vxpose.xlu0.b32.cont [3/16] 0.0, 128
        %217 = vxpose.xlu0.b32.cont [4/16] 0.0, 128
        %218 = vxpose.xlu0.b32.cont [5/16] 0.0, 128
        %219 = vxpose.xlu0.b32.cont [6/16] 0.0, 128
        %220 = vxpose.xlu0.b32.cont [7/16] 0.0, 128
        %221 = vxpose.xlu0.b32.cont [8/16] 0.0, 128
        %222 = vxpose.xlu0.b32.cont [9/16] 0.0, 128
        %223 = vxpose.xlu0.b32.cont [10/16] 0.0, 128
        %224 = vxpose.xlu0.b32.cont [11/16] 0.0, 128
        %225 = vxpose.xlu0.b32.cont [12/16] 0.0, 128
        %226 = vxpose.xlu0.b32.cont [13/16] 0.0, 128
        %227 = vxpose.xlu0.b32.cont [14/16] 0.0, 128
        %228 = vxpose.xlu0.b32.cont [15/16] 0.0, 128
        %229 = vxpose.xlu0.b32.end [16/16] 0.0, 128
        %v230 = vpop.trf.xlu0
        %v231 = vpop.trf.xlu0
        %v232 = vpop.trf.xlu0
        %v233 = vpop.trf.xlu0
        %v234 = vpop.trf.xlu0
        %v235 = vpop.trf.xlu0
        %v236 = vpop.trf.xlu0
        %v237 = vpop.trf.xlu0
        %v238 = vpop.trf.xlu0
        %v239 = vpop.trf.xlu0
        %v240 = vpop.trf.xlu0
        %v241 = vpop.trf.xlu0
        %v242 = vpop.trf.xlu0
        %v243 = vpop.trf.xlu0
        %v244 = vpop.trf.xlu0
        %v245 = vpop.trf.xlu0
        %246 = vxpose.xlu0.b32.start [1/16] %v183, 128
        %247 = vxpose.xlu0.b32.cont [2/16] 0.0, 128
        %248 = vxpose.xlu0.b32.cont [3/16] 0.0, 128
        %249 = vxpose.xlu0.b32.cont [4/16] 0.0, 128
        %250 = vxpose.xlu0.b32.cont [5/16] 0.0, 128
        %251 = vxpose.xlu0.b32.cont [6/16] 0.0, 128
        %252 = vxpose.xlu0.b32.cont [7/16] 0.0, 128
        %253 = vxpose.xlu0.b32.cont [8/16] 0.0, 128
        %254 = vxpose.xlu0.b32.cont [9/16] 0.0, 128
        %255 = vxpose.xlu0.b32.cont [10/16] 0.0, 128
        %256 = vxpose.xlu0.b32.cont [11/16] 0.0, 128
        %257 = vxpose.xlu0.b32.cont [12/16] 0.0, 128
        %258 = vxpose.xlu0.b32.cont [13/16] 0.0, 128
        %259 = vxpose.xlu0.b32.cont [14/16] 0.0, 128
        %260 = vxpose.xlu0.b32.cont [15/16] 0.0, 128
        %261 = vxpose.xlu0.b32.end [16/16] 0.0, 128
        %v262 = vpop.trf.xlu0
        %v263 = vpop.trf.xlu0
        %v264 = vpop.trf.xlu0
        %v265 = vpop.trf.xlu0
        %v266 = vpop.trf.xlu0
        %v267 = vpop.trf.xlu0
        %v268 = vpop.trf.xlu0
        %v269 = vpop.trf.xlu0
        %v270 = vpop.trf.xlu0
        %v271 = vpop.trf.xlu0
        %v272 = vpop.trf.xlu0
        %v273 = vpop.trf.xlu0
        %v274 = vpop.trf.xlu0
        %v275 = vpop.trf.xlu0
        %v276 = vpop.trf.xlu0
        %v277 = vpop.trf.xlu0
        %278 = vxpose.xlu0.b32.start [1/16] %v184, 128
        %279 = vxpose.xlu0.b32.cont [2/16] 0.0, 128
        %280 = vxpose.xlu0.b32.cont [3/16] 0.0, 128
        %281 = vxpose.xlu0.b32.cont [4/16] 0.0, 128
        %282 = vxpose.xlu0.b32.cont [5/16] 0.0, 128
        %283 = vxpose.xlu0.b32.cont [6/16] 0.0, 128
        %284 = vxpose.xlu0.b32.cont [7/16] 0.0, 128
        %285 = vxpose.xlu0.b32.cont [8/16] 0.0, 128
        %286 = vxpose.xlu0.b32.cont [9/16] 0.0, 128
        %287 = vxpose.xlu0.b32.cont [10/16] 0.0, 128
        %288 = vxpose.xlu0.b32.cont [11/16] 0.0, 128
        %289 = vxpose.xlu0.b32.cont [12/16] 0.0, 128
        %290 = vxpose.xlu0.b32.cont [13/16] 0.0, 128
        %291 = vxpose.xlu0.b32.cont [14/16] 0.0, 128
        %292 = vxpose.xlu0.b32.cont [15/16] 0.0, 128
        %293 = vxpose.xlu0.b32.end [16/16] 0.0, 128
        %v294 = vpop.trf.xlu0
        %v295 = vpop.trf.xlu0
        %v296 = vpop.trf.xlu0
        %v297 = vpop.trf.xlu0
        %v298 = vpop.trf.xlu0
        %v299 = vpop.trf.xlu0
        %v300 = vpop.trf.xlu0
        %v301 = vpop.trf.xlu0
        %v302 = vpop.trf.xlu0
        %v303 = vpop.trf.xlu0
        %v304 = vpop.trf.xlu0
        %v305 = vpop.trf.xlu0
        %v306 = vpop.trf.xlu0
        %v307 = vpop.trf.xlu0
        %v308 = vpop.trf.xlu0
        %v309 = vpop.trf.xlu0
        %310 = vxpose.xlu0.b32.start [1/16] %v185, 128
        %311 = vxpose.xlu0.b32.cont [2/16] 0.0, 128
        %312 = vxpose.xlu0.b32.cont [3/16] 0.0, 128
        %313 = vxpose.xlu0.b32.cont [4/16] 0.0, 128
        %314 = vxpose.xlu0.b32.cont [5/16] 0.0, 128
        %315 = vxpose.xlu0.b32.cont [6/16] 0.0, 128
        %316 = vxpose.xlu0.b32.cont [7/16] 0.0, 128
        %317 = vxpose.xlu0.b32.cont [8/16] 0.0, 128
        %318 = vxpose.xlu0.b32.cont [9/16] 0.0, 128
        %319 = vxpose.xlu0.b32.cont [10/16] 0.0, 128
        %320 = vxpose.xlu0.b32.cont [11/16] 0.0, 128
        %321 = vxpose.xlu0.b32.cont [12/16] 0.0, 128
        %322 = vxpose.xlu0.b32.cont [13/16] 0.0, 128
        %323 = vxpose.xlu0.b32.cont [14/16] 0.0, 128
        %324 = vxpose.xlu0.b32.cont [15/16] 0.0, 128
        %325 = vxpose.xlu0.b32.end [16/16] 0.0, 128
        %v326 = vpop.trf.xlu0
        %v327 = vpop.trf.xlu0
        %v328 = vpop.trf.xlu0
        %v329 = vpop.trf.xlu0
        %v330 = vpop.trf.xlu0
        %v331 = vpop.trf.xlu0
        %v332 = vpop.trf.xlu0
        %v333 = vpop.trf.xlu0
        %v334 = vpop.trf.xlu0
        %v335 = vpop.trf.xlu0
        %v336 = vpop.trf.xlu0
        %v337 = vpop.trf.xlu0
        %v338 = vpop.trf.xlu0
        %v339 = vpop.trf.xlu0
        %v340 = vpop.trf.xlu0
        %v341 = vpop.trf.xlu0
        %342 = vxpose.xlu0.b32.start [1/16] %v186, 128
        %343 = vxpose.xlu0.b32.cont [2/16] 0.0, 128
        %344 = vxpose.xlu0.b32.cont [3/16] 0.0, 128
        %345 = vxpose.xlu0.b32.cont [4/16] 0.0, 128
        %346 = vxpose.xlu0.b32.cont [5/16] 0.0, 128
        %347 = vxpose.xlu0.b32.cont [6/16] 0.0, 128
        %348 = vxpose.xlu0.b32.cont [7/16] 0.0, 128
        %349 = vxpose.xlu0.b32.cont [8/16] 0.0, 128
        %350 = vxpose.xlu0.b32.cont [9/16] 0.0, 128
        %351 = vxpose.xlu0.b32.cont [10/16] 0.0, 128
        %352 = vxpose.xlu0.b32.cont [11/16] 0.0, 128
        %353 = vxpose.xlu0.b32.cont [12/16] 0.0, 128
        %354 = vxpose.xlu0.b32.cont [13/16] 0.0, 128
        %355 = vxpose.xlu0.b32.cont [14/16] 0.0, 128
        %356 = vxpose.xlu0.b32.cont [15/16] 0.0, 128
        %357 = vxpose.xlu0.b32.end [16/16] 0.0, 128
        %v358 = vpop.trf.xlu0
        %v359 = vpop.trf.xlu0
        %v360 = vpop.trf.xlu0
        %v361 = vpop.trf.xlu0
        %v362 = vpop.trf.xlu0
        %v363 = vpop.trf.xlu0
        %v364 = vpop.trf.xlu0
        %v365 = vpop.trf.xlu0
        %v366 = vpop.trf.xlu0
        %v367 = vpop.trf.xlu0
        %v368 = vpop.trf.xlu0
        %v369 = vpop.trf.xlu0
        %v370 = vpop.trf.xlu0
        %v371 = vpop.trf.xlu0
        %v372 = vpop.trf.xlu0
        %v373 = vpop.trf.xlu0
        %374 = vxpose.xlu0.b32.start [1/16] %v187, 128
        %375 = vxpose.xlu0.b32.cont [2/16] 0.0, 128
        %376 = vxpose.xlu0.b32.cont [3/16] 0.0, 128
        %377 = vxpose.xlu0.b32.cont [4/16] 0.0, 128
        %378 = vxpose.xlu0.b32.cont [5/16] 0.0, 128
        %379 = vxpose.xlu0.b32.cont [6/16] 0.0, 128
        %380 = vxpose.xlu0.b32.cont [7/16] 0.0, 128
        %381 = vxpose.xlu0.b32.cont [8/16] 0.0, 128
        %382 = vxpose.xlu0.b32.cont [9/16] 0.0, 128
        %383 = vxpose.xlu0.b32.cont [10/16] 0.0, 128
        %384 = vxpose.xlu0.b32.cont [11/16] 0.0, 128
        %385 = vxpose.xlu0.b32.cont [12/16] 0.0, 128
        %386 = vxpose.xlu0.b32.cont [13/16] 0.0, 128
        %387 = vxpose.xlu0.b32.cont [14/16] 0.0, 128
        %388 = vxpose.xlu0.b32.cont [15/16] 0.0, 128
        %389 = vxpose.xlu0.b32.end [16/16] 0.0, 128
        %v390 = vpop.trf.xlu0
        %v391 = vpop.trf.xlu0
        %v392 = vpop.trf.xlu0
        %v393 = vpop.trf.xlu0
        %v394 = vpop.trf.xlu0
        %v395 = vpop.trf.xlu0
        %v396 = vpop.trf.xlu0
        %v397 = vpop.trf.xlu0
        %v398 = vpop.trf.xlu0
        %v399 = vpop.trf.xlu0
        %v400 = vpop.trf.xlu0
        %v401 = vpop.trf.xlu0
        %v402 = vpop.trf.xlu0
        %v403 = vpop.trf.xlu0
        %v404 = vpop.trf.xlu0
        %v405 = vpop.trf.xlu0
        %406 = vxpose.xlu0.b32.start [1/16] %v188, 128
        %407 = vxpose.xlu0.b32.cont [2/16] 0.0, 128
        %408 = vxpose.xlu0.b32.cont [3/16] 0.0, 128
        %409 = vxpose.xlu0.b32.cont [4/16] 0.0, 128
        %410 = vxpose.xlu0.b32.cont [5/16] 0.0, 128
        %411 = vxpose.xlu0.b32.cont [6/16] 0.0, 128
        %412 = vxpose.xlu0.b32.cont [7/16] 0.0, 128
        %413 = vxpose.xlu0.b32.cont [8/16] 0.0, 128
        %414 = vxpose.xlu0.b32.cont [9/16] 0.0, 128
        %415 = vxpose.xlu0.b32.cont [10/16] 0.0, 128
        %416 = vxpose.xlu0.b32.cont [11/16] 0.0, 128
        %417 = vxpose.xlu0.b32.cont [12/16] 0.0, 128
        %418 = vxpose.xlu0.b32.cont [13/16] 0.0, 128
        %419 = vxpose.xlu0.b32.cont [14/16] 0.0, 128
        %420 = vxpose.xlu0.b32.cont [15/16] 0.0, 128
        %421 = vxpose.xlu0.b32.end [16/16] 0.0, 128
        %v422 = vpop.trf.xlu0
        %v423 = vpop.trf.xlu0
        %v424 = vpop.trf.xlu0
        %v425 = vpop.trf.xlu0
        %v426 = vpop.trf.xlu0
        %v427 = vpop.trf.xlu0
        %v428 = vpop.trf.xlu0
        %v429 = vpop.trf.xlu0
        %v430 = vpop.trf.xlu0
        %v431 = vpop.trf.xlu0
        %v432 = vpop.trf.xlu0
        %v433 = vpop.trf.xlu0
        %v434 = vpop.trf.xlu0
        %v435 = vpop.trf.xlu0
        %v436 = vpop.trf.xlu0
        %v437 = vpop.trf.xlu0
        %438 = vxpose.xlu0.b32.start [1/16] %v189, 128
        %439 = vxpose.xlu0.b32.cont [2/16] 0.0, 128
        %440 = vxpose.xlu0.b32.cont [3/16] 0.0, 128
        %441 = vxpose.xlu0.b32.cont [4/16] 0.0, 128
        %442 = vxpose.xlu0.b32.cont [5/16] 0.0, 128
        %443 = vxpose.xlu0.b32.cont [6/16] 0.0, 128
        %444 = vxpose.xlu0.b32.cont [7/16] 0.0, 128
        %445 = vxpose.xlu0.b32.cont [8/16] 0.0, 128
        %446 = vxpose.xlu0.b32.cont [9/16] 0.0, 128
        %447 = vxpose.xlu0.b32.cont [10/16] 0.0, 128
        %448 = vxpose.xlu0.b32.cont [11/16] 0.0, 128
        %449 = vxpose.xlu0.b32.cont [12/16] 0.0, 128
        %450 = vxpose.xlu0.b32.cont [13/16] 0.0, 128
        %451 = vxpose.xlu0.b32.cont [14/16] 0.0, 128
        %452 = vxpose.xlu0.b32.cont [15/16] 0.0, 128
        %453 = vxpose.xlu0.b32.end [16/16] 0.0, 128
        %v454 = vpop.trf.xlu0
        %v455 = vpop.trf.xlu0
        %v456 = vpop.trf.xlu0
        %v457 = vpop.trf.xlu0
        %v458 = vpop.trf.xlu0
        %v459 = vpop.trf.xlu0
        %v460 = vpop.trf.xlu0
        %v461 = vpop.trf.xlu0
        %v462 = vpop.trf.xlu0
        %v463 = vpop.trf.xlu0
        %v464 = vpop.trf.xlu0
        %v465 = vpop.trf.xlu0
        %v466 = vpop.trf.xlu0
        %v467 = vpop.trf.xlu0
        %v468 = vpop.trf.xlu0
        %v469 = vpop.trf.xlu0
        %470 = vxpose.xlu0.b32.start [1/16] %v190, 128
        %471 = vxpose.xlu0.b32.cont [2/16] 0.0, 128
        %472 = vxpose.xlu0.b32.cont [3/16] 0.0, 128
        %473 = vxpose.xlu0.b32.cont [4/16] 0.0, 128
        %474 = vxpose.xlu0.b32.cont [5/16] 0.0, 128
        %475 = vxpose.xlu0.b32.cont [6/16] 0.0, 128
        %476 = vxpose.xlu0.b32.cont [7/16] 0.0, 128
        %477 = vxpose.xlu0.b32.cont [8/16] 0.0, 128
        %478 = vxpose.xlu0.b32.cont [9/16] 0.0, 128
        %479 = vxpose.xlu0.b32.cont [10/16] 0.0, 128
        %480 = vxpose.xlu0.b32.cont [11/16] 0.0, 128
        %481 = vxpose.xlu0.b32.cont [12/16] 0.0, 128
        %482 = vxpose.xlu0.b32.cont [13/16] 0.0, 128
        %483 = vxpose.xlu0.b32.cont [14/16] 0.0, 128
        %484 = vxpose.xlu0.b32.cont [15/16] 0.0, 128
        %485 = vxpose.xlu0.b32.end [16/16] 0.0, 128
        %v486 = vpop.trf.xlu0
        %v487 = vpop.trf.xlu0
        %v488 = vpop.trf.xlu0
        %v489 = vpop.trf.xlu0
        %v490 = vpop.trf.xlu0
        %v491 = vpop.trf.xlu0
        %v492 = vpop.trf.xlu0
        %v493 = vpop.trf.xlu0
        %v494 = vpop.trf.xlu0
        %v495 = vpop.trf.xlu0
        %v496 = vpop.trf.xlu0
        %v497 = vpop.trf.xlu0
        %v498 = vpop.trf.xlu0
        %v499 = vpop.trf.xlu0
        %v500 = vpop.trf.xlu0
        %v501 = vpop.trf.xlu0
        %502 = vxpose.xlu0.b32.start [1/16] %v191, 128
        %503 = vxpose.xlu0.b32.cont [2/16] 0.0, 128
        %504 = vxpose.xlu0.b32.cont [3/16] 0.0, 128
        %505 = vxpose.xlu0.b32.cont [4/16] 0.0, 128
        %506 = vxpose.xlu0.b32.cont [5/16] 0.0, 128
        %507 = vxpose.xlu0.b32.cont [6/16] 0.0, 128
        %508 = vxpose.xlu0.b32.cont [7/16] 0.0, 128
        %509 = vxpose.xlu0.b32.cont [8/16] 0.0, 128
        %510 = vxpose.xlu0.b32.cont [9/16] 0.0, 128
        %511 = vxpose.xlu0.b32.cont [10/16] 0.0, 128
        %512 = vxpose.xlu0.b32.cont [11/16] 0.0, 128
        %513 = vxpose.xlu0.b32.cont [12/16] 0.0, 128
        %514 = vxpose.xlu0.b32.cont [13/16] 0.0, 128
        %515 = vxpose.xlu0.b32.cont [14/16] 0.0, 128
        %516 = vxpose.xlu0.b32.cont [15/16] 0.0, 128
        %517 = vxpose.xlu0.b32.end [16/16] 0.0, 128
        %v518 = vpop.trf.xlu0
        %v519 = vpop.trf.xlu0
        %v520 = vpop.trf.xlu0
        %v521 = vpop.trf.xlu0
        %v522 = vpop.trf.xlu0
        %v523 = vpop.trf.xlu0
        %v524 = vpop.trf.xlu0
        %v525 = vpop.trf.xlu0
        %v526 = vpop.trf.xlu0
        %v527 = vpop.trf.xlu0
        %v528 = vpop.trf.xlu0
        %v529 = vpop.trf.xlu0
        %v530 = vpop.trf.xlu0
        %v531 = vpop.trf.xlu0
        %v532 = vpop.trf.xlu0
        %v533 = vpop.trf.xlu0
        %534 = vxpose.xlu0.b32.start [1/16] %v192, 128
        %535 = vxpose.xlu0.b32.cont [2/16] 0.0, 128
        %536 = vxpose.xlu0.b32.cont [3/16] 0.0, 128
        %537 = vxpose.xlu0.b32.cont [4/16] 0.0, 128
        %538 = vxpose.xlu0.b32.cont [5/16] 0.0, 128
        %539 = vxpose.xlu0.b32.cont [6/16] 0.0, 128
        %540 = vxpose.xlu0.b32.cont [7/16] 0.0, 128
        %541 = vxpose.xlu0.b32.cont [8/16] 0.0, 128
        %542 = vxpose.xlu0.b32.cont [9/16] 0.0, 128
        %543 = vxpose.xlu0.b32.cont [10/16] 0.0, 128
        %544 = vxpose.xlu0.b32.cont [11/16] 0.0, 128
        %545 = vxpose.xlu0.b32.cont [12/16] 0.0, 128
        %546 = vxpose.xlu0.b32.cont [13/16] 0.0, 128
        %547 = vxpose.xlu0.b32.cont [14/16] 0.0, 128
        %548 = vxpose.xlu0.b32.cont [15/16] 0.0, 128
        %549 = vxpose.xlu0.b32.end [16/16] 0.0, 128
        %v550 = vpop.trf.xlu0
        %v551 = vpop.trf.xlu0
        %v552 = vpop.trf.xlu0
        %v553 = vpop.trf.xlu0
        %v554 = vpop.trf.xlu0
        %v555 = vpop.trf.xlu0
        %v556 = vpop.trf.xlu0
        %v557 = vpop.trf.xlu0
        %v558 = vpop.trf.xlu0
        %v559 = vpop.trf.xlu0
        %v560 = vpop.trf.xlu0
        %v561 = vpop.trf.xlu0
        %v562 = vpop.trf.xlu0
        %v563 = vpop.trf.xlu0
        %v564 = vpop.trf.xlu0
        %v565 = vpop.trf.xlu0
        %566 = vxpose.xlu0.b32.start [1/16] %v193, 128
        %567 = vxpose.xlu0.b32.cont [2/16] 0.0, 128
        %568 = vxpose.xlu0.b32.cont [3/16] 0.0, 128
        %569 = vxpose.xlu0.b32.cont [4/16] 0.0, 128
        %570 = vxpose.xlu0.b32.cont [5/16] 0.0, 128
        %571 = vxpose.xlu0.b32.cont [6/16] 0.0, 128
        %572 = vxpose.xlu0.b32.cont [7/16] 0.0, 128
        %573 = vxpose.xlu0.b32.cont [8/16] 0.0, 128
        %574 = vxpose.xlu0.b32.cont [9/16] 0.0, 128
        %575 = vxpose.xlu0.b32.cont [10/16] 0.0, 128
        %576 = vxpose.xlu0.b32.cont [11/16] 0.0, 128
        %577 = vxpose.xlu0.b32.cont [12/16] 0.0, 128
        %578 = vxpose.xlu0.b32.cont [13/16] 0.0, 128
        %579 = vxpose.xlu0.b32.cont [14/16] 0.0, 128
        %580 = vxpose.xlu0.b32.cont [15/16] 0.0, 128
        %581 = vxpose.xlu0.b32.end [16/16] 0.0, 128
        %v582 = vpop.trf.xlu0
        %v583 = vpop.trf.xlu0
        %v584 = vpop.trf.xlu0
        %v585 = vpop.trf.xlu0
        %v586 = vpop.trf.xlu0
        %v587 = vpop.trf.xlu0
        %v588 = vpop.trf.xlu0
        %v589 = vpop.trf.xlu0
        %v590 = vpop.trf.xlu0
        %v591 = vpop.trf.xlu0
        %v592 = vpop.trf.xlu0
        %v593 = vpop.trf.xlu0
        %v594 = vpop.trf.xlu0
        %v595 = vpop.trf.xlu0
        %v596 = vpop.trf.xlu0
        %v597 = vpop.trf.xlu0
        %598 = vxpose.xlu0.b32.start [1/16] %v194, 128
        %599 = vxpose.xlu0.b32.cont [2/16] 0.0, 128
        %600 = vxpose.xlu0.b32.cont [3/16] 0.0, 128
        %601 = vxpose.xlu0.b32.cont [4/16] 0.0, 128
        %602 = vxpose.xlu0.b32.cont [5/16] 0.0, 128
        %603 = vxpose.xlu0.b32.cont [6/16] 0.0, 128
        %604 = vxpose.xlu0.b32.cont [7/16] 0.0, 128
        %605 = vxpose.xlu0.b32.cont [8/16] 0.0, 128
        %606 = vxpose.xlu0.b32.cont [9/16] 0.0, 128
        %607 = vxpose.xlu0.b32.cont [10/16] 0.0, 128
        %608 = vxpose.xlu0.b32.cont [11/16] 0.0, 128
        %609 = vxpose.xlu0.b32.cont [12/16] 0.0, 128
        %610 = vxpose.xlu0.b32.cont [13/16] 0.0, 128
        %611 = vxpose.xlu0.b32.cont [14/16] 0.0, 128
        %612 = vxpose.xlu0.b32.cont [15/16] 0.0, 128
        %613 = vxpose.xlu0.b32.end [16/16] 0.0, 128
        %v614 = vpop.trf.xlu0
        %v615 = vpop.trf.xlu0
        %v616 = vpop.trf.xlu0
        %v617 = vpop.trf.xlu0
        %v618 = vpop.trf.xlu0
        %v619 = vpop.trf.xlu0
        %v620 = vpop.trf.xlu0
        %v621 = vpop.trf.xlu0
        %v622 = vpop.trf.xlu0
        %v623 = vpop.trf.xlu0
        %v624 = vpop.trf.xlu0
        %v625 = vpop.trf.xlu0
        %v626 = vpop.trf.xlu0
        %v627 = vpop.trf.xlu0
        %v628 = vpop.trf.xlu0
        %v629 = vpop.trf.xlu0
        %630 = vxpose.xlu0.b32.start [1/16] %v195, 128
        %631 = vxpose.xlu0.b32.cont [2/16] 0.0, 128
        %632 = vxpose.xlu0.b32.cont [3/16] 0.0, 128
        %633 = vxpose.xlu0.b32.cont [4/16] 0.0, 128
        %634 = vxpose.xlu0.b32.cont [5/16] 0.0, 128
        %635 = vxpose.xlu0.b32.cont [6/16] 0.0, 128
        %636 = vxpose.xlu0.b32.cont [7/16] 0.0, 128
        %637 = vxpose.xlu0.b32.cont [8/16] 0.0, 128
        %638 = vxpose.xlu0.b32.cont [9/16] 0.0, 128
        %639 = vxpose.xlu0.b32.cont [10/16] 0.0, 128
        %640 = vxpose.xlu0.b32.cont [11/16] 0.0, 128
        %641 = vxpose.xlu0.b32.cont [12/16] 0.0, 128
        %642 = vxpose.xlu0.b32.cont [13/16] 0.0, 128
        %643 = vxpose.xlu0.b32.cont [14/16] 0.0, 128
        %644 = vxpose.xlu0.b32.cont [15/16] 0.0, 128
        %645 = vxpose.xlu0.b32.end [16/16] 0.0, 128
        %v646 = vpop.trf.xlu0
        %v647 = vpop.trf.xlu0
        %v648 = vpop.trf.xlu0
        %v649 = vpop.trf.xlu0
        %v650 = vpop.trf.xlu0
        %v651 = vpop.trf.xlu0
        %v652 = vpop.trf.xlu0
        %v653 = vpop.trf.xlu0
        %v654 = vpop.trf.xlu0
        %v655 = vpop.trf.xlu0
        %v656 = vpop.trf.xlu0
        %v657 = vpop.trf.xlu0
        %v658 = vpop.trf.xlu0
        %v659 = vpop.trf.xlu0
        %v660 = vpop.trf.xlu0
        %v661 = vpop.trf.xlu0
        %662 = vxpose.xlu0.b32.start [1/16] %v196, 128
        %663 = vxpose.xlu0.b32.cont [2/16] 0.0, 128
        %664 = vxpose.xlu0.b32.cont [3/16] 0.0, 128
        %665 = vxpose.xlu0.b32.cont [4/16] 0.0, 128
        %666 = vxpose.xlu0.b32.cont [5/16] 0.0, 128
        %667 = vxpose.xlu0.b32.cont [6/16] 0.0, 128
        %668 = vxpose.xlu0.b32.cont [7/16] 0.0, 128
        %669 = vxpose.xlu0.b32.cont [8/16] 0.0, 128
        %670 = vxpose.xlu0.b32.cont [9/16] 0.0, 128
        %671 = vxpose.xlu0.b32.cont [10/16] 0.0, 128
        %672 = vxpose.xlu0.b32.cont [11/16] 0.0, 128
        %673 = vxpose.xlu0.b32.cont [12/16] 0.0, 128
        %674 = vxpose.xlu0.b32.cont [13/16] 0.0, 128
        %675 = vxpose.xlu0.b32.cont [14/16] 0.0, 128
        %676 = vxpose.xlu0.b32.cont [15/16] 0.0, 128
        %677 = vxpose.xlu0.b32.end [16/16] 0.0, 128
        %v678 = vpop.trf.xlu0
        %v679 = vpop.trf.xlu0
        %v680 = vpop.trf.xlu0
        %v681 = vpop.trf.xlu0
        %v682 = vpop.trf.xlu0
        %v683 = vpop.trf.xlu0
        %v684 = vpop.trf.xlu0
        %v685 = vpop.trf.xlu0
        %v686 = vpop.trf.xlu0
        %v687 = vpop.trf.xlu0
        %v688 = vpop.trf.xlu0
        %v689 = vpop.trf.xlu0
        %v690 = vpop.trf.xlu0
        %v691 = vpop.trf.xlu0
        %v692 = vpop.trf.xlu0
        %v693 = vpop.trf.xlu0
        %694 = vxpose.xlu0.b32.start [1/16] %v197, 128
        %695 = vxpose.xlu0.b32.cont [2/16] 0.0, 128
        %696 = vxpose.xlu0.b32.cont [3/16] 0.0, 128
        %697 = vxpose.xlu0.b32.cont [4/16] 0.0, 128
        %698 = vxpose.xlu0.b32.cont [5/16] 0.0, 128
        %699 = vxpose.xlu0.b32.cont [6/16] 0.0, 128
        %700 = vxpose.xlu0.b32.cont [7/16] 0.0, 128
        %701 = vxpose.xlu0.b32.cont [8/16] 0.0, 128
        %702 = vxpose.xlu0.b32.cont [9/16] 0.0, 128
        %703 = vxpose.xlu0.b32.cont [10/16] 0.0, 128
        %704 = vxpose.xlu0.b32.cont [11/16] 0.0, 128
        %705 = vxpose.xlu0.b32.cont [12/16] 0.0, 128
        %706 = vxpose.xlu0.b32.cont [13/16] 0.0, 128
        %707 = vxpose.xlu0.b32.cont [14/16] 0.0, 128
        %708 = vxpose.xlu0.b32.cont [15/16] 0.0, 128
        %709 = vxpose.xlu0.b32.end [16/16] 0.0, 128
        %v710 = vpop.trf.xlu0
        %v711 = vpop.trf.xlu0
        %v712 = vpop.trf.xlu0
        %v713 = vpop.trf.xlu0
        %v714 = vpop.trf.xlu0
        %v715 = vpop.trf.xlu0
        %v716 = vpop.trf.xlu0
        %v717 = vpop.trf.xlu0
        %v718 = vpop.trf.xlu0
        %v719 = vpop.trf.xlu0
        %v720 = vpop.trf.xlu0
        %v721 = vpop.trf.xlu0
        %v722 = vpop.trf.xlu0
        %v723 = vpop.trf.xlu0
        %v724 = vpop.trf.xlu0
        %v725 = vpop.trf.xlu0
        %726 = vxpose.xlu0.b32.start [1/16] %v198, 128
        %727 = vxpose.xlu0.b32.cont [2/16] 0.0, 128
        %728 = vxpose.xlu0.b32.cont [3/16] 0.0, 128
        %729 = vxpose.xlu0.b32.cont [4/16] 0.0, 128
        %730 = vxpose.xlu0.b32.cont [5/16] 0.0, 128
        %731 = vxpose.xlu0.b32.cont [6/16] 0.0, 128
        %732 = vxpose.xlu0.b32.cont [7/16] 0.0, 128
        %733 = vxpose.xlu0.b32.cont [8/16] 0.0, 128
        %734 = vxpose.xlu0.b32.cont [9/16] 0.0, 128
        %735 = vxpose.xlu0.b32.cont [10/16] 0.0, 128
        %736 = vxpose.xlu0.b32.cont [11/16] 0.0, 128
        %737 = vxpose.xlu0.b32.cont [12/16] 0.0, 128
        %738 = vxpose.xlu0.b32.cont [13/16] 0.0, 128
        %739 = vxpose.xlu0.b32.cont [14/16] 0.0, 128
        %740 = vxpose.xlu0.b32.cont [15/16] 0.0, 128
        %741 = vxpose.xlu0.b32.end [16/16] 0.0, 128
        %v742 = vpop.trf.xlu0
        %v743 = vpop.trf.xlu0
        %v744 = vpop.trf.xlu0
        %v745 = vpop.trf.xlu0
        %v746 = vpop.trf.xlu0
        %v747 = vpop.trf.xlu0
        %v748 = vpop.trf.xlu0
        %v749 = vpop.trf.xlu0
        %v750 = vpop.trf.xlu0
        %v751 = vpop.trf.xlu0
        %v752 = vpop.trf.xlu0
        %v753 = vpop.trf.xlu0
        %v754 = vpop.trf.xlu0
        %v755 = vpop.trf.xlu0
        %v756 = vpop.trf.xlu0
        %v757 = vpop.trf.xlu0
        %758 = vxpose.xlu0.b32.start [1/16] %v199, 128
        %759 = vxpose.xlu0.b32.cont [2/16] 0.0, 128
        %760 = vxpose.xlu0.b32.cont [3/16] 0.0, 128
        %761 = vxpose.xlu0.b32.cont [4/16] 0.0, 128
        %762 = vxpose.xlu0.b32.cont [5/16] 0.0, 128
        %763 = vxpose.xlu0.b32.cont [6/16] 0.0, 128
        %764 = vxpose.xlu0.b32.cont [7/16] 0.0, 128
        %765 = vxpose.xlu0.b32.cont [8/16] 0.0, 128
        %766 = vxpose.xlu0.b32.cont [9/16] 0.0, 128
        %767 = vxpose.xlu0.b32.cont [10/16] 0.0, 128
        %768 = vxpose.xlu0.b32.cont [11/16] 0.0, 128
        %769 = vxpose.xlu0.b32.cont [12/16] 0.0, 128
        %770 = vxpose.xlu0.b32.cont [13/16] 0.0, 128
        %771 = vxpose.xlu0.b32.cont [14/16] 0.0, 128
        %772 = vxpose.xlu0.b32.cont [15/16] 0.0, 128
        %773 = vxpose.xlu0.b32.end [16/16] 0.0, 128
        %v774 = vpop.trf.xlu0
        %v775 = vpop.trf.xlu0
        %v776 = vpop.trf.xlu0
        %v777 = vpop.trf.xlu0
        %v778 = vpop.trf.xlu0
        %v779 = vpop.trf.xlu0
        %v780 = vpop.trf.xlu0
        %v781 = vpop.trf.xlu0
        %v782 = vpop.trf.xlu0
        %v783 = vpop.trf.xlu0
        %v784 = vpop.trf.xlu0
        %v785 = vpop.trf.xlu0
        %v786 = vpop.trf.xlu0
        %v787 = vpop.trf.xlu0
        %v788 = vpop.trf.xlu0
        %v789 = vpop.trf.xlu0
        %790 = vxpose.xlu0.b32.start [1/16] %v200, 128
        %791 = vxpose.xlu0.b32.cont [2/16] 0.0, 128
        %792 = vxpose.xlu0.b32.cont [3/16] 0.0, 128
        %793 = vxpose.xlu0.b32.cont [4/16] 0.0, 128
        %794 = vxpose.xlu0.b32.cont [5/16] 0.0, 128
        %795 = vxpose.xlu0.b32.cont [6/16] 0.0, 128
        %796 = vxpose.xlu0.b32.cont [7/16] 0.0, 128
        %797 = vxpose.xlu0.b32.cont [8/16] 0.0, 128
        %798 = vxpose.xlu0.b32.cont [9/16] 0.0, 128
        %799 = vxpose.xlu0.b32.cont [10/16] 0.0, 128
        %800 = vxpose.xlu0.b32.cont [11/16] 0.0, 128
        %801 = vxpose.xlu0.b32.cont [12/16] 0.0, 128
        %802 = vxpose.xlu0.b32.cont [13/16] 0.0, 128
        %803 = vxpose.xlu0.b32.cont [14/16] 0.0, 128
        %804 = vxpose.xlu0.b32.cont [15/16] 0.0, 128
        %805 = vxpose.xlu0.b32.end [16/16] 0.0, 128
        %v806 = vpop.trf.xlu0
        %v807 = vpop.trf.xlu0
        %v808 = vpop.trf.xlu0
        %v809 = vpop.trf.xlu0
        %v810 = vpop.trf.xlu0
        %v811 = vpop.trf.xlu0
        %v812 = vpop.trf.xlu0
        %v813 = vpop.trf.xlu0
        %v814 = vpop.trf.xlu0
        %v815 = vpop.trf.xlu0
        %v816 = vpop.trf.xlu0
        %v817 = vpop.trf.xlu0
        %v818 = vpop.trf.xlu0
        %v819 = vpop.trf.xlu0
        %v820 = vpop.trf.xlu0
        %v821 = vpop.trf.xlu0
        %822 = vxpose.xlu0.b32.start [1/16] %v201, 128
        %823 = vxpose.xlu0.b32.cont [2/16] 0.0, 128
        %824 = vxpose.xlu0.b32.cont [3/16] 0.0, 128
        %825 = vxpose.xlu0.b32.cont [4/16] 0.0, 128
        %826 = vxpose.xlu0.b32.cont [5/16] 0.0, 128
        %827 = vxpose.xlu0.b32.cont [6/16] 0.0, 128
        %828 = vxpose.xlu0.b32.cont [7/16] 0.0, 128
        %829 = vxpose.xlu0.b32.cont [8/16] 0.0, 128
        %830 = vxpose.xlu0.b32.cont [9/16] 0.0, 128
        %831 = vxpose.xlu0.b32.cont [10/16] 0.0, 128
        %832 = vxpose.xlu0.b32.cont [11/16] 0.0, 128
        %833 = vxpose.xlu0.b32.cont [12/16] 0.0, 128
        %834 = vxpose.xlu0.b32.cont [13/16] 0.0, 128
        %835 = vxpose.xlu0.b32.cont [14/16] 0.0, 128
        %836 = vxpose.xlu0.b32.cont [15/16] 0.0, 128
        %837 = vxpose.xlu0.b32.end [16/16] 0.0, 128
        %v838 = vpop.trf.xlu0
        %v839 = vpop.trf.xlu0
        %v840 = vpop.trf.xlu0
        %v841 = vpop.trf.xlu0
        %v842 = vpop.trf.xlu0
        %v843 = vpop.trf.xlu0
        %v844 = vpop.trf.xlu0
        %v845 = vpop.trf.xlu0
        %v846 = vpop.trf.xlu0
        %v847 = vpop.trf.xlu0
        %v848 = vpop.trf.xlu0
        %v849 = vpop.trf.xlu0
        %v850 = vpop.trf.xlu0
        %v851 = vpop.trf.xlu0
        %v852 = vpop.trf.xlu0
        %v853 = vpop.trf.xlu0
        %854 = vxpose.xlu0.b32.start [1/16] %v202, 128
        %855 = vxpose.xlu0.b32.cont [2/16] 0.0, 128
        %856 = vxpose.xlu0.b32.cont [3/16] 0.0, 128
        %857 = vxpose.xlu0.b32.cont [4/16] 0.0, 128
        %858 = vxpose.xlu0.b32.cont [5/16] 0.0, 128
        %859 = vxpose.xlu0.b32.cont [6/16] 0.0, 128
        %860 = vxpose.xlu0.b32.cont [7/16] 0.0, 128
        %861 = vxpose.xlu0.b32.cont [8/16] 0.0, 128
        %862 = vxpose.xlu0.b32.cont [9/16] 0.0, 128
        %863 = vxpose.xlu0.b32.cont [10/16] 0.0, 128
        %864 = vxpose.xlu0.b32.cont [11/16] 0.0, 128
        %865 = vxpose.xlu0.b32.cont [12/16] 0.0, 128
        %866 = vxpose.xlu0.b32.cont [13/16] 0.0, 128
        %867 = vxpose.xlu0.b32.cont [14/16] 0.0, 128
        %868 = vxpose.xlu0.b32.cont [15/16] 0.0, 128
        %869 = vxpose.xlu0.b32.end [16/16] 0.0, 128
        %v870 = vpop.trf.xlu0
        %v871 = vpop.trf.xlu0
        %v872 = vpop.trf.xlu0
        %v873 = vpop.trf.xlu0
        %v874 = vpop.trf.xlu0
        %v875 = vpop.trf.xlu0
        %v876 = vpop.trf.xlu0
        %v877 = vpop.trf.xlu0
        %v878 = vpop.trf.xlu0
        %v879 = vpop.trf.xlu0
        %v880 = vpop.trf.xlu0
        %v881 = vpop.trf.xlu0
        %v882 = vpop.trf.xlu0
        %v883 = vpop.trf.xlu0
        %v884 = vpop.trf.xlu0
        %v885 = vpop.trf.xlu0
        %886 = vxpose.xlu0.b32.start [1/16] %v203, 128
        %887 = vxpose.xlu0.b32.cont [2/16] 0.0, 128
        %888 = vxpose.xlu0.b32.cont [3/16] 0.0, 128
        %889 = vxpose.xlu0.b32.cont [4/16] 0.0, 128
        %890 = vxpose.xlu0.b32.cont [5/16] 0.0, 128
        %891 = vxpose.xlu0.b32.cont [6/16] 0.0, 128
        %892 = vxpose.xlu0.b32.cont [7/16] 0.0, 128
        %893 = vxpose.xlu0.b32.cont [8/16] 0.0, 128
        %894 = vxpose.xlu0.b32.cont [9/16] 0.0, 128
        %895 = vxpose.xlu0.b32.cont [10/16] 0.0, 128
        %896 = vxpose.xlu0.b32.cont [11/16] 0.0, 128
        %897 = vxpose.xlu0.b32.cont [12/16] 0.0, 128
        %898 = vxpose.xlu0.b32.cont [13/16] 0.0, 128
        %899 = vxpose.xlu0.b32.cont [14/16] 0.0, 128
        %900 = vxpose.xlu0.b32.cont [15/16] 0.0, 128
        %901 = vxpose.xlu0.b32.end [16/16] 0.0, 128
        %v902 = vpop.trf.xlu0
        %v903 = vpop.trf.xlu0
        %v904 = vpop.trf.xlu0
        %v905 = vpop.trf.xlu0
        %v906 = vpop.trf.xlu0
        %v907 = vpop.trf.xlu0
        %v908 = vpop.trf.xlu0
        %v909 = vpop.trf.xlu0
        %v910 = vpop.trf.xlu0
        %v911 = vpop.trf.xlu0
        %v912 = vpop.trf.xlu0
        %v913 = vpop.trf.xlu0
        %v914 = vpop.trf.xlu0
        %v915 = vpop.trf.xlu0
        %v916 = vpop.trf.xlu0
        %v917 = vpop.trf.xlu0
        %918 = vxpose.xlu0.b32.start [1/16] %v204, 128
        %919 = vxpose.xlu0.b32.cont [2/16] 0.0, 128
        %920 = vxpose.xlu0.b32.cont [3/16] 0.0, 128
        %921 = vxpose.xlu0.b32.cont [4/16] 0.0, 128
        %922 = vxpose.xlu0.b32.cont [5/16] 0.0, 128
        %923 = vxpose.xlu0.b32.cont [6/16] 0.0, 128
        %924 = vxpose.xlu0.b32.cont [7/16] 0.0, 128
        %925 = vxpose.xlu0.b32.cont [8/16] 0.0, 128
        %926 = vxpose.xlu0.b32.cont [9/16] 0.0, 128
        %927 = vxpose.xlu0.b32.cont [10/16] 0.0, 128
        %928 = vxpose.xlu0.b32.cont [11/16] 0.0, 128
        %929 = vxpose.xlu0.b32.cont [12/16] 0.0, 128
        %930 = vxpose.xlu0.b32.cont [13/16] 0.0, 128
        %931 = vxpose.xlu0.b32.cont [14/16] 0.0, 128
        %932 = vxpose.xlu0.b32.cont [15/16] 0.0, 128
        %933 = vxpose.xlu0.b32.end [16/16] 0.0, 128
        %v934 = vpop.trf.xlu0
        %v935 = vpop.trf.xlu0
        %v936 = vpop.trf.xlu0
        %v937 = vpop.trf.xlu0
        %v938 = vpop.trf.xlu0
        %v939 = vpop.trf.xlu0
        %v940 = vpop.trf.xlu0
        %v941 = vpop.trf.xlu0
        %v942 = vpop.trf.xlu0
        %v943 = vpop.trf.xlu0
        %v944 = vpop.trf.xlu0
        %v945 = vpop.trf.xlu0
        %v946 = vpop.trf.xlu0
        %v947 = vpop.trf.xlu0
        %v948 = vpop.trf.xlu0
        %v949 = vpop.trf.xlu0
        %950 = vxpose.xlu0.b32.start [1/16] %v205, 128
        %951 = vxpose.xlu0.b32.cont [2/16] 0.0, 128
        %952 = vxpose.xlu0.b32.cont [3/16] 0.0, 128
        %953 = vxpose.xlu0.b32.cont [4/16] 0.0, 128
        %954 = vxpose.xlu0.b32.cont [5/16] 0.0, 128
        %955 = vxpose.xlu0.b32.cont [6/16] 0.0, 128
        %956 = vxpose.xlu0.b32.cont [7/16] 0.0, 128
        %957 = vxpose.xlu0.b32.cont [8/16] 0.0, 128
        %958 = vxpose.xlu0.b32.cont [9/16] 0.0, 128
        %959 = vxpose.xlu0.b32.cont [10/16] 0.0, 128
        %960 = vxpose.xlu0.b32.cont [11/16] 0.0, 128
        %961 = vxpose.xlu0.b32.cont [12/16] 0.0, 128
        %962 = vxpose.xlu0.b32.cont [13/16] 0.0, 128
        %963 = vxpose.xlu0.b32.cont [14/16] 0.0, 128
        %964 = vxpose.xlu0.b32.cont [15/16] 0.0, 128
        %965 = vxpose.xlu0.b32.end [16/16] 0.0, 128
        %v966 = vpop.trf.xlu0
        %v967 = vpop.trf.xlu0
        %v968 = vpop.trf.xlu0
        %v969 = vpop.trf.xlu0
        %v970 = vpop.trf.xlu0
        %v971 = vpop.trf.xlu0
        %v972 = vpop.trf.xlu0
        %v973 = vpop.trf.xlu0
        %v974 = vpop.trf.xlu0
        %v975 = vpop.trf.xlu0
        %v976 = vpop.trf.xlu0
        %v977 = vpop.trf.xlu0
        %v978 = vpop.trf.xlu0
        %v979 = vpop.trf.xlu0
        %v980 = vpop.trf.xlu0
        %v981 = vpop.trf.xlu0
        %982 = vxpose.xlu0.b32.start [1/16] %v206, 128
        %983 = vxpose.xlu0.b32.cont [2/16] 0.0, 128
        %984 = vxpose.xlu0.b32.cont [3/16] 0.0, 128
        %985 = vxpose.xlu0.b32.cont [4/16] 0.0, 128
        %986 = vxpose.xlu0.b32.cont [5/16] 0.0, 128
        %987 = vxpose.xlu0.b32.cont [6/16] 0.0, 128
        %988 = vxpose.xlu0.b32.cont [7/16] 0.0, 128
        %989 = vxpose.xlu0.b32.cont [8/16] 0.0, 128
        %990 = vxpose.xlu0.b32.cont [9/16] 0.0, 128
        %991 = vxpose.xlu0.b32.cont [10/16] 0.0, 128
        %992 = vxpose.xlu0.b32.cont [11/16] 0.0, 128
        %993 = vxpose.xlu0.b32.cont [12/16] 0.0, 128
        %994 = vxpose.xlu0.b32.cont [13/16] 0.0, 128
        %995 = vxpose.xlu0.b32.cont [14/16] 0.0, 128
        %996 = vxpose.xlu0.b32.cont [15/16] 0.0, 128
        %997 = vxpose.xlu0.b32.end [16/16] 0.0, 128
        %v998 = vpop.trf.xlu0
        %v999 = vpop.trf.xlu0
        %v1000 = vpop.trf.xlu0
        %v1001 = vpop.trf.xlu0
        %v1002 = vpop.trf.xlu0
        %v1003 = vpop.trf.xlu0
        %v1004 = vpop.trf.xlu0
        %v1005 = vpop.trf.xlu0
        %v1006 = vpop.trf.xlu0
        %v1007 = vpop.trf.xlu0
        %v1008 = vpop.trf.xlu0
        %v1009 = vpop.trf.xlu0
        %v1010 = vpop.trf.xlu0
        %v1011 = vpop.trf.xlu0
        %v1012 = vpop.trf.xlu0
        %v1013 = vpop.trf.xlu0
        %1014 = vxpose.xlu0.b32.start [1/16] %v207, 128
        %1015 = vxpose.xlu0.b32.cont [2/16] 0.0, 128
        %1016 = vxpose.xlu0.b32.cont [3/16] 0.0, 128
        %1017 = vxpose.xlu0.b32.cont [4/16] 0.0, 128
        %1018 = vxpose.xlu0.b32.cont [5/16] 0.0, 128
        %1019 = vxpose.xlu0.b32.cont [6/16] 0.0, 128
        %1020 = vxpose.xlu0.b32.cont [7/16] 0.0, 128
        %1021 = vxpose.xlu0.b32.cont [8/16] 0.0, 128
        %1022 = vxpose.xlu0.b32.cont [9/16] 0.0, 128
        %1023 = vxpose.xlu0.b32.cont [10/16] 0.0, 128
        %1024 = vxpose.xlu0.b32.cont [11/16] 0.0, 128
        %1025 = vxpose.xlu0.b32.cont [12/16] 0.0, 128
        %1026 = vxpose.xlu0.b32.cont [13/16] 0.0, 128
        %1027 = vxpose.xlu0.b32.cont [14/16] 0.0, 128
        %1028 = vxpose.xlu0.b32.cont [15/16] 0.0, 128
        %1029 = vxpose.xlu0.b32.end [16/16] 0.0, 128
        %v1030 = vpop.trf.xlu0
        %v1031 = vpop.trf.xlu0
        %v1032 = vpop.trf.xlu0
        %v1033 = vpop.trf.xlu0
        %v1034 = vpop.trf.xlu0
        %v1035 = vpop.trf.xlu0
        %v1036 = vpop.trf.xlu0
        %v1037 = vpop.trf.xlu0
        %v1038 = vpop.trf.xlu0
        %v1039 = vpop.trf.xlu0
        %v1040 = vpop.trf.xlu0
        %v1041 = vpop.trf.xlu0
        %v1042 = vpop.trf.xlu0
        %v1043 = vpop.trf.xlu0
        %v1044 = vpop.trf.xlu0
        %v1045 = vpop.trf.xlu0
        %1046 = vxpose.xlu0.b32.start [1/16] %v208, 128
        %1047 = vxpose.xlu0.b32.cont [2/16] 0.0, 128
        %1048 = vxpose.xlu0.b32.cont [3/16] 0.0, 128
        %1049 = vxpose.xlu0.b32.cont [4/16] 0.0, 128
        %1050 = vxpose.xlu0.b32.cont [5/16] 0.0, 128
        %1051 = vxpose.xlu0.b32.cont [6/16] 0.0, 128
        %1052 = vxpose.xlu0.b32.cont [7/16] 0.0, 128
        %1053 = vxpose.xlu0.b32.cont [8/16] 0.0, 128
        %1054 = vxpose.xlu0.b32.cont [9/16] 0.0, 128
        %1055 = vxpose.xlu0.b32.cont [10/16] 0.0, 128
        %1056 = vxpose.xlu0.b32.cont [11/16] 0.0, 128
        %1057 = vxpose.xlu0.b32.cont [12/16] 0.0, 128
        %1058 = vxpose.xlu0.b32.cont [13/16] 0.0, 128
        %1059 = vxpose.xlu0.b32.cont [14/16] 0.0, 128
        %1060 = vxpose.xlu0.b32.cont [15/16] 0.0, 128
        %1061 = vxpose.xlu0.b32.end [16/16] 0.0, 128
        %v1062 = vpop.trf.xlu0
        %v1063 = vpop.trf.xlu0
        %v1064 = vpop.trf.xlu0
        %v1065 = vpop.trf.xlu0
        %v1066 = vpop.trf.xlu0
        %v1067 = vpop.trf.xlu0
        %v1068 = vpop.trf.xlu0
        %v1069 = vpop.trf.xlu0
        %v1070 = vpop.trf.xlu0
        %v1071 = vpop.trf.xlu0
        %v1072 = vpop.trf.xlu0
        %v1073 = vpop.trf.xlu0
        %v1074 = vpop.trf.xlu0
        %v1075 = vpop.trf.xlu0
        %v1076 = vpop.trf.xlu0
        %v1077 = vpop.trf.xlu0
        %1078 = vxpose.xlu0.b32.start [1/16] %v209, 128
        %1079 = vxpose.xlu0.b32.cont [2/16] 0.0, 128
        %1080 = vxpose.xlu0.b32.cont [3/16] 0.0, 128
        %1081 = vxpose.xlu0.b32.cont [4/16] 0.0, 128
        %1082 = vxpose.xlu0.b32.cont [5/16] 0.0, 128
        %1083 = vxpose.xlu0.b32.cont [6/16] 0.0, 128
        %1084 = vxpose.xlu0.b32.cont [7/16] 0.0, 128
        %1085 = vxpose.xlu0.b32.cont [8/16] 0.0, 128
        %1086 = vxpose.xlu0.b32.cont [9/16] 0.0, 128
        %1087 = vxpose.xlu0.b32.cont [10/16] 0.0, 128
        %1088 = vxpose.xlu0.b32.cont [11/16] 0.0, 128
        %1089 = vxpose.xlu0.b32.cont [12/16] 0.0, 128
        %1090 = vxpose.xlu0.b32.cont [13/16] 0.0, 128
        %1091 = vxpose.xlu0.b32.cont [14/16] 0.0, 128
        %1092 = vxpose.xlu0.b32.cont [15/16] 0.0, 128
        %1093 = vxpose.xlu0.b32.end [16/16] 0.0, 128
        %v1094 = vpop.trf.xlu0
        %v1095 = vpop.trf.xlu0
        %v1096 = vpop.trf.xlu0
        %v1097 = vpop.trf.xlu0
        %v1098 = vpop.trf.xlu0
        %v1099 = vpop.trf.xlu0
        %v1100 = vpop.trf.xlu0
        %v1101 = vpop.trf.xlu0
        %v1102 = vpop.trf.xlu0
        %v1103 = vpop.trf.xlu0
        %v1104 = vpop.trf.xlu0
        %v1105 = vpop.trf.xlu0
        %v1106 = vpop.trf.xlu0
        %v1107 = vpop.trf.xlu0
        %v1108 = vpop.trf.xlu0
        %v1109 = vpop.trf.xlu0
        %1110 = vxpose.xlu0.b32.start [1/16] %v210, 128
        %1111 = vxpose.xlu0.b32.cont [2/16] 0.0, 128
        %1112 = vxpose.xlu0.b32.cont [3/16] 0.0, 128
        %1113 = vxpose.xlu0.b32.cont [4/16] 0.0, 128
        %1114 = vxpose.xlu0.b32.cont [5/16] 0.0, 128
        %1115 = vxpose.xlu0.b32.cont [6/16] 0.0, 128
        %1116 = vxpose.xlu0.b32.cont [7/16] 0.0, 128
        %1117 = vxpose.xlu0.b32.cont [8/16] 0.0, 128
        %1118 = vxpose.xlu0.b32.cont [9/16] 0.0, 128
        %1119 = vxpose.xlu0.b32.cont [10/16] 0.0, 128
        %1120 = vxpose.xlu0.b32.cont [11/16] 0.0, 128
        %1121 = vxpose.xlu0.b32.cont [12/16] 0.0, 128
        %1122 = vxpose.xlu0.b32.cont [13/16] 0.0, 128
        %1123 = vxpose.xlu0.b32.cont [14/16] 0.0, 128
        %1124 = vxpose.xlu0.b32.cont [15/16] 0.0, 128
        %1125 = vxpose.xlu0.b32.end [16/16] 0.0, 128
        %v1126 = vpop.trf.xlu0
        %v1127 = vpop.trf.xlu0
        %v1128 = vpop.trf.xlu0
        %v1129 = vpop.trf.xlu0
        %v1130 = vpop.trf.xlu0
        %v1131 = vpop.trf.xlu0
        %v1132 = vpop.trf.xlu0
        %v1133 = vpop.trf.xlu0
        %v1134 = vpop.trf.xlu0
        %v1135 = vpop.trf.xlu0
        %v1136 = vpop.trf.xlu0
        %v1137 = vpop.trf.xlu0
        %v1138 = vpop.trf.xlu0
        %v1139 = vpop.trf.xlu0
        %v1140 = vpop.trf.xlu0
        %v1141 = vpop.trf.xlu0
        %1142 = vxpose.xlu0.b32.start [1/16] %v211, 128
        %1143 = vxpose.xlu0.b32.cont [2/16] 0.0, 128
        %1144 = vxpose.xlu0.b32.cont [3/16] 0.0, 128
        %1145 = vxpose.xlu0.b32.cont [4/16] 0.0, 128
        %1146 = vxpose.xlu0.b32.cont [5/16] 0.0, 128
        %1147 = vxpose.xlu0.b32.cont [6/16] 0.0, 128
        %1148 = vxpose.xlu0.b32.cont [7/16] 0.0, 128
        %1149 = vxpose.xlu0.b32.cont [8/16] 0.0, 128
        %1150 = vxpose.xlu0.b32.cont [9/16] 0.0, 128
        %1151 = vxpose.xlu0.b32.cont [10/16] 0.0, 128
        %1152 = vxpose.xlu0.b32.cont [11/16] 0.0, 128
        %1153 = vxpose.xlu0.b32.cont [12/16] 0.0, 128
        %1154 = vxpose.xlu0.b32.cont [13/16] 0.0, 128
        %1155 = vxpose.xlu0.b32.cont [14/16] 0.0, 128
        %1156 = vxpose.xlu0.b32.cont [15/16] 0.0, 128
        %1157 = vxpose.xlu0.b32.end [16/16] 0.0, 128
        %v1158 = vpop.trf.xlu0
        %v1159 = vpop.trf.xlu0
        %v1160 = vpop.trf.xlu0
        %v1161 = vpop.trf.xlu0
        %v1162 = vpop.trf.xlu0
        %v1163 = vpop.trf.xlu0
        %v1164 = vpop.trf.xlu0
        %v1165 = vpop.trf.xlu0
        %v1166 = vpop.trf.xlu0
        %v1167 = vpop.trf.xlu0
        %v1168 = vpop.trf.xlu0
        %v1169 = vpop.trf.xlu0
        %v1170 = vpop.trf.xlu0
        %v1171 = vpop.trf.xlu0
        %v1172 = vpop.trf.xlu0
        %v1173 = vpop.trf.xlu0
        %1174 = vxpose.xlu0.b32.start [1/16] %v212, 128
        %1175 = vxpose.xlu0.b32.cont [2/16] 0.0, 128
        %1176 = vxpose.xlu0.b32.cont [3/16] 0.0, 128
        %1177 = vxpose.xlu0.b32.cont [4/16] 0.0, 128
        %1178 = vxpose.xlu0.b32.cont [5/16] 0.0, 128
        %1179 = vxpose.xlu0.b32.cont [6/16] 0.0, 128
        %1180 = vxpose.xlu0.b32.cont [7/16] 0.0, 128
        %1181 = vxpose.xlu0.b32.cont [8/16] 0.0, 128
        %1182 = vxpose.xlu0.b32.cont [9/16] 0.0, 128
        %1183 = vxpose.xlu0.b32.cont [10/16] 0.0, 128
        %1184 = vxpose.xlu0.b32.cont [11/16] 0.0, 128
        %1185 = vxpose.xlu0.b32.cont [12/16] 0.0, 128
        %1186 = vxpose.xlu0.b32.cont [13/16] 0.0, 128
        %1187 = vxpose.xlu0.b32.cont [14/16] 0.0, 128
        %1188 = vxpose.xlu0.b32.cont [15/16] 0.0, 128
        %1189 = vxpose.xlu0.b32.end [16/16] 0.0, 128
        %v1190 = vpop.trf.xlu0
        %v1191 = vpop.trf.xlu0
        %v1192 = vpop.trf.xlu0
        %v1193 = vpop.trf.xlu0
        %v1194 = vpop.trf.xlu0
        %v1195 = vpop.trf.xlu0
        %v1196 = vpop.trf.xlu0
        %v1197 = vpop.trf.xlu0
        %v1198 = vpop.trf.xlu0
        %v1199 = vpop.trf.xlu0
        %v1200 = vpop.trf.xlu0
        %v1201 = vpop.trf.xlu0
        %v1202 = vpop.trf.xlu0
        %v1203 = vpop.trf.xlu0
        %v1204 = vpop.trf.xlu0
        %v1205 = vpop.trf.xlu0
        %1206 = vxpose.xlu0.b32.start [1/16] %v213, 128
        %1207 = vxpose.xlu0.b32.cont [2/16] 0.0, 128
        %1208 = vxpose.xlu0.b32.cont [3/16] 0.0, 128
        %1209 = vxpose.xlu0.b32.cont [4/16] 0.0, 128
        %1210 = vxpose.xlu0.b32.cont [5/16] 0.0, 128
        %1211 = vxpose.xlu0.b32.cont [6/16] 0.0, 128
        %1212 = vxpose.xlu0.b32.cont [7/16] 0.0, 128
        %1213 = vxpose.xlu0.b32.cont [8/16] 0.0, 128
        %1214 = vxpose.xlu0.b32.cont [9/16] 0.0, 128
        %1215 = vxpose.xlu0.b32.cont [10/16] 0.0, 128
        %1216 = vxpose.xlu0.b32.cont [11/16] 0.0, 128
        %1217 = vxpose.xlu0.b32.cont [12/16] 0.0, 128
        %1218 = vxpose.xlu0.b32.cont [13/16] 0.0, 128
        %1219 = vxpose.xlu0.b32.cont [14/16] 0.0, 128
        %1220 = vxpose.xlu0.b32.cont [15/16] 0.0, 128
        %1221 = vxpose.xlu0.b32.end [16/16] 0.0, 128
        %v1222 = vpop.trf.xlu0
        %v1223 = vpop.trf.xlu0
        %v1224 = vpop.trf.xlu0
        %v1225 = vpop.trf.xlu0
        %v1226 = vpop.trf.xlu0
        %v1227 = vpop.trf.xlu0
        %v1228 = vpop.trf.xlu0
        %v1229 = vpop.trf.xlu0
        %v1230 = vpop.trf.xlu0
        %v1231 = vpop.trf.xlu0
        %v1232 = vpop.trf.xlu0
        %v1233 = vpop.trf.xlu0
        %v1234 = vpop.trf.xlu0
        %v1235 = vpop.trf.xlu0
        %v1236 = vpop.trf.xlu0
        %v1237 = vpop.trf.xlu0
        %vm1238 = vcmask 64512
        %1239 = vst.msk [vmem:[%s180] sm:$0xff] %vm1238, %v230
        %1240 = vst.msk [vmem:[%s180 + $0x8] sm:$0xff] %vm1238, %v231
        %1241 = vst.msk [vmem:[%s180 + $0x10] sm:$0xff] %vm1238, %v232
        %1242 = vst.msk [vmem:[%s180 + $0x18] sm:$0xff] %vm1238, %v233
        %1243 = vst.msk [vmem:[%s180 + $0x20] sm:$0xff] %vm1238, %v234
        %1244 = vst.msk [vmem:[%s180 + $0x28] sm:$0xff] %vm1238, %v235
        %1245 = vst.msk [vmem:[%s180 + $0x30] sm:$0xff] %vm1238, %v236
        %1246 = vst.msk [vmem:[%s180 + $0x38] sm:$0xff] %vm1238, %v237
        %1247 = vst.msk [vmem:[%s180 + $0x40] sm:$0xff] %vm1238, %v238
        %1248 = vst.msk [vmem:[%s180 + $0x48] sm:$0xff] %vm1238, %v239
        %1249 = vst.msk [vmem:[%s180 + $0x50] sm:$0xff] %vm1238, %v240
        %1250 = vst.msk [vmem:[%s180 + $0x58] sm:$0xff] %vm1238, %v241
        %1251 = vst.msk [vmem:[%s180 + $0x60] sm:$0xff] %vm1238, %v242
        %1252 = vst.msk [vmem:[%s180 + $0x68] sm:$0xff] %vm1238, %v243
        %1253 = vst.msk [vmem:[%s180 + $0x70] sm:$0xff] %vm1238, %v244
        %1254 = vst.msk [vmem:[%s180 + $0x78] sm:$0xff] %vm1238, %v245
        %1255 = vst.msk [vmem:[%s180 + $0x80] sm:$0xff] %vm1238, %v262
        %1256 = vst.msk [vmem:[%s180 + $0x88] sm:$0xff] %vm1238, %v263
        %1257 = vst.msk [vmem:[%s180 + $0x90] sm:$0xff] %vm1238, %v264
        %1258 = vst.msk [vmem:[%s180 + $0x98] sm:$0xff] %vm1238, %v265
        %1259 = vst.msk [vmem:[%s180 + $0xa0] sm:$0xff] %vm1238, %v266
        %1260 = vst.msk [vmem:[%s180 + $0xa8] sm:$0xff] %vm1238, %v267
        %1261 = vst.msk [vmem:[%s180 + $0xb0] sm:$0xff] %vm1238, %v268
        %1262 = vst.msk [vmem:[%s180 + $0xb8] sm:$0xff] %vm1238, %v269
        %1263 = vst.msk [vmem:[%s180 + $0xc0] sm:$0xff] %vm1238, %v270
        %1264 = vst.msk [vmem:[%s180 + $0xc8] sm:$0xff] %vm1238, %v271
        %1265 = vst.msk [vmem:[%s180 + $0xd0] sm:$0xff] %vm1238, %v272
        %1266 = vst.msk [vmem:[%s180 + $0xd8] sm:$0xff] %vm1238, %v273
        %1267 = vst.msk [vmem:[%s180 + $0xe0] sm:$0xff] %vm1238, %v274
        %1268 = vst.msk [vmem:[%s180 + $0xe8] sm:$0xff] %vm1238, %v275
        %1269 = vst.msk [vmem:[%s180 + $0xf0] sm:$0xff] %vm1238, %v276
        %1270 = vst.msk [vmem:[%s180 + $0xf8] sm:$0xff] %vm1238, %v277
        %1271 = vst.msk [vmem:[%s180 + $0x100] sm:$0xff] %vm1238, %v294
        %1272 = vst.msk [vmem:[%s180 + $0x108] sm:$0xff] %vm1238, %v295
        %1273 = vst.msk [vmem:[%s180 + $0x110] sm:$0xff] %vm1238, %v296
        %1274 = vst.msk [vmem:[%s180 + $0x118] sm:$0xff] %vm1238, %v297
        %1275 = vst.msk [vmem:[%s180 + $0x120] sm:$0xff] %vm1238, %v298
        %1276 = vst.msk [vmem:[%s180 + $0x128] sm:$0xff] %vm1238, %v299
        %1277 = vst.msk [vmem:[%s180 + $0x130] sm:$0xff] %vm1238, %v300
        %1278 = vst.msk [vmem:[%s180 + $0x138] sm:$0xff] %vm1238, %v301
        %1279 = vst.msk [vmem:[%s180 + $0x140] sm:$0xff] %vm1238, %v302
        %1280 = vst.msk [vmem:[%s180 + $0x148] sm:$0xff] %vm1238, %v303
        %1281 = vst.msk [vmem:[%s180 + $0x150] sm:$0xff] %vm1238, %v304
        %1282 = vst.msk [vmem:[%s180 + $0x158] sm:$0xff] %vm1238, %v305
        %1283 = vst.msk [vmem:[%s180 + $0x160] sm:$0xff] %vm1238, %v306
        %1284 = vst.msk [vmem:[%s180 + $0x168] sm:$0xff] %vm1238, %v307
        %1285 = vst.msk [vmem:[%s180 + $0x170] sm:$0xff] %vm1238, %v308
        %1286 = vst.msk [vmem:[%s180 + $0x178] sm:$0xff] %vm1238, %v309
        %1287 = vst.msk [vmem:[%s180 + $0x180] sm:$0xff] %vm1238, %v326
        %1288 = vst.msk [vmem:[%s180 + $0x188] sm:$0xff] %vm1238, %v327
        %1289 = vst.msk [vmem:[%s180 + $0x190] sm:$0xff] %vm1238, %v328
        %1290 = vst.msk [vmem:[%s180 + $0x198] sm:$0xff] %vm1238, %v329
        %1291 = vst.msk [vmem:[%s180 + $0x1a0] sm:$0xff] %vm1238, %v330
        %1292 = vst.msk [vmem:[%s180 + $0x1a8] sm:$0xff] %vm1238, %v331
        %1293 = vst.msk [vmem:[%s180 + $0x1b0] sm:$0xff] %vm1238, %v332
        %1294 = vst.msk [vmem:[%s180 + $0x1b8] sm:$0xff] %vm1238, %v333
        %1295 = vst.msk [vmem:[%s180 + $0x1c0] sm:$0xff] %vm1238, %v334
        %1296 = vst.msk [vmem:[%s180 + $0x1c8] sm:$0xff] %vm1238, %v335
        %1297 = vst.msk [vmem:[%s180 + $0x1d0] sm:$0xff] %vm1238, %v336
        %1298 = vst.msk [vmem:[%s180 + $0x1d8] sm:$0xff] %vm1238, %v337
        %1299 = vst.msk [vmem:[%s180 + $0x1e0] sm:$0xff] %vm1238, %v338
        %1300 = vst.msk [vmem:[%s180 + $0x1e8] sm:$0xff] %vm1238, %v339
        %1301 = vst.msk [vmem:[%s180 + $0x1f0] sm:$0xff] %vm1238, %v340
        %1302 = vst.msk [vmem:[%s180 + $0x1f8] sm:$0xff] %vm1238, %v341
        %1303 = vst.msk [vmem:[%s180 + $0x200] sm:$0xff] %vm1238, %v358
        %1304 = vst.msk [vmem:[%s180 + $0x208] sm:$0xff] %vm1238, %v359
        %1305 = vst.msk [vmem:[%s180 + $0x210] sm:$0xff] %vm1238, %v360
        %1306 = vst.msk [vmem:[%s180 + $0x218] sm:$0xff] %vm1238, %v361
        %1307 = vst.msk [vmem:[%s180 + $0x220] sm:$0xff] %vm1238, %v362
        %1308 = vst.msk [vmem:[%s180 + $0x228] sm:$0xff] %vm1238, %v363
        %1309 = vst.msk [vmem:[%s180 + $0x230] sm:$0xff] %vm1238, %v364
        %1310 = vst.msk [vmem:[%s180 + $0x238] sm:$0xff] %vm1238, %v365
        %1311 = vst.msk [vmem:[%s180 + $0x240] sm:$0xff] %vm1238, %v366
        %1312 = vst.msk [vmem:[%s180 + $0x248] sm:$0xff] %vm1238, %v367
        %1313 = vst.msk [vmem:[%s180 + $0x250] sm:$0xff] %vm1238, %v368
        %1314 = vst.msk [vmem:[%s180 + $0x258] sm:$0xff] %vm1238, %v369
        %1315 = vst.msk [vmem:[%s180 + $0x260] sm:$0xff] %vm1238, %v370
        %1316 = vst.msk [vmem:[%s180 + $0x268] sm:$0xff] %vm1238, %v371
        %1317 = vst.msk [vmem:[%s180 + $0x270] sm:$0xff] %vm1238, %v372
        %1318 = vst.msk [vmem:[%s180 + $0x278] sm:$0xff] %vm1238, %v373
        %1319 = vst.msk [vmem:[%s180 + $0x280] sm:$0xff] %vm1238, %v390
        %1320 = vst.msk [vmem:[%s180 + $0x288] sm:$0xff] %vm1238, %v391
        %1321 = vst.msk [vmem:[%s180 + $0x290] sm:$0xff] %vm1238, %v392
        %1322 = vst.msk [vmem:[%s180 + $0x298] sm:$0xff] %vm1238, %v393
        %1323 = vst.msk [vmem:[%s180 + $0x2a0] sm:$0xff] %vm1238, %v394
        %1324 = vst.msk [vmem:[%s180 + $0x2a8] sm:$0xff] %vm1238, %v395
        %1325 = vst.msk [vmem:[%s180 + $0x2b0] sm:$0xff] %vm1238, %v396
        %1326 = vst.msk [vmem:[%s180 + $0x2b8] sm:$0xff] %vm1238, %v397
        %1327 = vst.msk [vmem:[%s180 + $0x2c0] sm:$0xff] %vm1238, %v398
        %1328 = vst.msk [vmem:[%s180 + $0x2c8] sm:$0xff] %vm1238, %v399
        %1329 = vst.msk [vmem:[%s180 + $0x2d0] sm:$0xff] %vm1238, %v400
        %1330 = vst.msk [vmem:[%s180 + $0x2d8] sm:$0xff] %vm1238, %v401
        %1331 = vst.msk [vmem:[%s180 + $0x2e0] sm:$0xff] %vm1238, %v402
        %1332 = vst.msk [vmem:[%s180 + $0x2e8] sm:$0xff] %vm1238, %v403
        %1333 = vst.msk [vmem:[%s180 + $0x2f0] sm:$0xff] %vm1238, %v404
        %1334 = vst.msk [vmem:[%s180 + $0x2f8] sm:$0xff] %vm1238, %v405
        %1335 = vst.msk [vmem:[%s180 + $0x300] sm:$0xff] %vm1238, %v422
        %1336 = vst.msk [vmem:[%s180 + $0x308] sm:$0xff] %vm1238, %v423
        %1337 = vst.msk [vmem:[%s180 + $0x310] sm:$0xff] %vm1238, %v424
        %1338 = vst.msk [vmem:[%s180 + $0x318] sm:$0xff] %vm1238, %v425
        %1339 = vst.msk [vmem:[%s180 + $0x320] sm:$0xff] %vm1238, %v426
        %1340 = vst.msk [vmem:[%s180 + $0x328] sm:$0xff] %vm1238, %v427
        %1341 = vst.msk [vmem:[%s180 + $0x330] sm:$0xff] %vm1238, %v428
        %1342 = vst.msk [vmem:[%s180 + $0x338] sm:$0xff] %vm1238, %v429
        %1343 = vst.msk [vmem:[%s180 + $0x340] sm:$0xff] %vm1238, %v430
        %1344 = vst.msk [vmem:[%s180 + $0x348] sm:$0xff] %vm1238, %v431
        %1345 = vst.msk [vmem:[%s180 + $0x350] sm:$0xff] %vm1238, %v432
        %1346 = vst.msk [vmem:[%s180 + $0x358] sm:$0xff] %vm1238, %v433
        %1347 = vst.msk [vmem:[%s180 + $0x360] sm:$0xff] %vm1238, %v434
        %1348 = vst.msk [vmem:[%s180 + $0x368] sm:$0xff] %vm1238, %v435
        %1349 = vst.msk [vmem:[%s180 + $0x370] sm:$0xff] %vm1238, %v436
        %1350 = vst.msk [vmem:[%s180 + $0x378] sm:$0xff] %vm1238, %v437
        %1351 = vst.msk [vmem:[%s180 + $0x380] sm:$0xff] %vm1238, %v454
        %1352 = vst.msk [vmem:[%s180 + $0x388] sm:$0xff] %vm1238, %v455
        %1353 = vst.msk [vmem:[%s180 + $0x390] sm:$0xff] %vm1238, %v456
        %1354 = vst.msk [vmem:[%s180 + $0x398] sm:$0xff] %vm1238, %v457
        %1355 = vst.msk [vmem:[%s180 + $0x3a0] sm:$0xff] %vm1238, %v458
        %1356 = vst.msk [vmem:[%s180 + $0x3a8] sm:$0xff] %vm1238, %v459
        %1357 = vst.msk [vmem:[%s180 + $0x3b0] sm:$0xff] %vm1238, %v460
        %1358 = vst.msk [vmem:[%s180 + $0x3b8] sm:$0xff] %vm1238, %v461
        %1359 = vst.msk [vmem:[%s180 + $0x3c0] sm:$0xff] %vm1238, %v462
        %1360 = vst.msk [vmem:[%s180 + $0x3c8] sm:$0xff] %vm1238, %v463
        %1361 = vst.msk [vmem:[%s180 + $0x3d0] sm:$0xff] %vm1238, %v464
        %1362 = vst.msk [vmem:[%s180 + $0x3d8] sm:$0xff] %vm1238, %v465
        %1363 = vst.msk [vmem:[%s180 + $0x3e0] sm:$0xff] %vm1238, %v466
        %1364 = vst.msk [vmem:[%s180 + $0x3e8] sm:$0xff] %vm1238, %v467
        %1365 = vst.msk [vmem:[%s180 + $0x3f0] sm:$0xff] %vm1238, %v468
        %1366 = vst.msk [vmem:[%s180 + $0x3f8] sm:$0xff] %vm1238, %v469
        %1367 = vst.msk [vmem:[%s180 + $0x400] sm:$0xff] %vm1238, %v486
        %1368 = vst.msk [vmem:[%s180 + $0x408] sm:$0xff] %vm1238, %v487
        %1369 = vst.msk [vmem:[%s180 + $0x410] sm:$0xff] %vm1238, %v488
        %1370 = vst.msk [vmem:[%s180 + $0x418] sm:$0xff] %vm1238, %v489
        %1371 = vst.msk [vmem:[%s180 + $0x420] sm:$0xff] %vm1238, %v490
        %1372 = vst.msk [vmem:[%s180 + $0x428] sm:$0xff] %vm1238, %v491
        %1373 = vst.msk [vmem:[%s180 + $0x430] sm:$0xff] %vm1238, %v492
        %1374 = vst.msk [vmem:[%s180 + $0x438] sm:$0xff] %vm1238, %v493
        %1375 = vst.msk [vmem:[%s180 + $0x440] sm:$0xff] %vm1238, %v494
        %1376 = vst.msk [vmem:[%s180 + $0x448] sm:$0xff] %vm1238, %v495
        %1377 = vst.msk [vmem:[%s180 + $0x450] sm:$0xff] %vm1238, %v496
        %1378 = vst.msk [vmem:[%s180 + $0x458] sm:$0xff] %vm1238, %v497
        %1379 = vst.msk [vmem:[%s180 + $0x460] sm:$0xff] %vm1238, %v498
        %1380 = vst.msk [vmem:[%s180 + $0x468] sm:$0xff] %vm1238, %v499
        %1381 = vst.msk [vmem:[%s180 + $0x470] sm:$0xff] %vm1238, %v500
        %1382 = vst.msk [vmem:[%s180 + $0x478] sm:$0xff] %vm1238, %v501
        %1383 = vst.msk [vmem:[%s180 + $0x480] sm:$0xff] %vm1238, %v518
        %1384 = vst.msk [vmem:[%s180 + $0x488] sm:$0xff] %vm1238, %v519
        %1385 = vst.msk [vmem:[%s180 + $0x490] sm:$0xff] %vm1238, %v520
        %1386 = vst.msk [vmem:[%s180 + $0x498] sm:$0xff] %vm1238, %v521
        %1387 = vst.msk [vmem:[%s180 + $0x4a0] sm:$0xff] %vm1238, %v522
        %1388 = vst.msk [vmem:[%s180 + $0x4a8] sm:$0xff] %vm1238, %v523
        %1389 = vst.msk [vmem:[%s180 + $0x4b0] sm:$0xff] %vm1238, %v524
        %1390 = vst.msk [vmem:[%s180 + $0x4b8] sm:$0xff] %vm1238, %v525
        %1391 = vst.msk [vmem:[%s180 + $0x4c0] sm:$0xff] %vm1238, %v526
        %1392 = vst.msk [vmem:[%s180 + $0x4c8] sm:$0xff] %vm1238, %v527
        %1393 = vst.msk [vmem:[%s180 + $0x4d0] sm:$0xff] %vm1238, %v528
        %1394 = vst.msk [vmem:[%s180 + $0x4d8] sm:$0xff] %vm1238, %v529
        %1395 = vst.msk [vmem:[%s180 + $0x4e0] sm:$0xff] %vm1238, %v530
        %1396 = vst.msk [vmem:[%s180 + $0x4e8] sm:$0xff] %vm1238, %v531
        %1397 = vst.msk [vmem:[%s180 + $0x4f0] sm:$0xff] %vm1238, %v532
        %1398 = vst.msk [vmem:[%s180 + $0x4f8] sm:$0xff] %vm1238, %v533
        %1399 = vst.msk [vmem:[%s180 + $0x500] sm:$0xff] %vm1238, %v550
        %1400 = vst.msk [vmem:[%s180 + $0x508] sm:$0xff] %vm1238, %v551
        %1401 = vst.msk [vmem:[%s180 + $0x510] sm:$0xff] %vm1238, %v552
        %1402 = vst.msk [vmem:[%s180 + $0x518] sm:$0xff] %vm1238, %v553
        %1403 = vst.msk [vmem:[%s180 + $0x520] sm:$0xff] %vm1238, %v554
        %1404 = vst.msk [vmem:[%s180 + $0x528] sm:$0xff] %vm1238, %v555
        %1405 = vst.msk [vmem:[%s180 + $0x530] sm:$0xff] %vm1238, %v556
        %1406 = vst.msk [vmem:[%s180 + $0x538] sm:$0xff] %vm1238, %v557
        %1407 = vst.msk [vmem:[%s180 + $0x540] sm:$0xff] %vm1238, %v558
        %1408 = vst.msk [vmem:[%s180 + $0x548] sm:$0xff] %vm1238, %v559
        %1409 = vst.msk [vmem:[%s180 + $0x550] sm:$0xff] %vm1238, %v560
        %1410 = vst.msk [vmem:[%s180 + $0x558] sm:$0xff] %vm1238, %v561
        %1411 = vst.msk [vmem:[%s180 + $0x560] sm:$0xff] %vm1238, %v562
        %1412 = vst.msk [vmem:[%s180 + $0x568] sm:$0xff] %vm1238, %v563
        %1413 = vst.msk [vmem:[%s180 + $0x570] sm:$0xff] %vm1238, %v564
        %1414 = vst.msk [vmem:[%s180 + $0x578] sm:$0xff] %vm1238, %v565
        %1415 = vst.msk [vmem:[%s180 + $0x580] sm:$0xff] %vm1238, %v582
        %1416 = vst.msk [vmem:[%s180 + $0x588] sm:$0xff] %vm1238, %v583
        %1417 = vst.msk [vmem:[%s180 + $0x590] sm:$0xff] %vm1238, %v584
        %1418 = vst.msk [vmem:[%s180 + $0x598] sm:$0xff] %vm1238, %v585
        %1419 = vst.msk [vmem:[%s180 + $0x5a0] sm:$0xff] %vm1238, %v586
        %1420 = vst.msk [vmem:[%s180 + $0x5a8] sm:$0xff] %vm1238, %v587
        %1421 = vst.msk [vmem:[%s180 + $0x5b0] sm:$0xff] %vm1238, %v588
        %1422 = vst.msk [vmem:[%s180 + $0x5b8] sm:$0xff] %vm1238, %v589
        %1423 = vst.msk [vmem:[%s180 + $0x5c0] sm:$0xff] %vm1238, %v590
        %1424 = vst.msk [vmem:[%s180 + $0x5c8] sm:$0xff] %vm1238, %v591
        %1425 = vst.msk [vmem:[%s180 + $0x5d0] sm:$0xff] %vm1238, %v592
        %1426 = vst.msk [vmem:[%s180 + $0x5d8] sm:$0xff] %vm1238, %v593
        %1427 = vst.msk [vmem:[%s180 + $0x5e0] sm:$0xff] %vm1238, %v594
        %1428 = vst.msk [vmem:[%s180 + $0x5e8] sm:$0xff] %vm1238, %v595
        %1429 = vst.msk [vmem:[%s180 + $0x5f0] sm:$0xff] %vm1238, %v596
        %1430 = vst.msk [vmem:[%s180 + $0x5f8] sm:$0xff] %vm1238, %v597
        %1431 = vst.msk [vmem:[%s180 + $0x600] sm:$0xff] %vm1238, %v614
        %1432 = vst.msk [vmem:[%s180 + $0x608] sm:$0xff] %vm1238, %v615
        %1433 = vst.msk [vmem:[%s180 + $0x610] sm:$0xff] %vm1238, %v616
        %1434 = vst.msk [vmem:[%s180 + $0x618] sm:$0xff] %vm1238, %v617
        %1435 = vst.msk [vmem:[%s180 + $0x620] sm:$0xff] %vm1238, %v618
        %1436 = vst.msk [vmem:[%s180 + $0x628] sm:$0xff] %vm1238, %v619
        %1437 = vst.msk [vmem:[%s180 + $0x630] sm:$0xff] %vm1238, %v620
        %1438 = vst.msk [vmem:[%s180 + $0x638] sm:$0xff] %vm1238, %v621
        %1439 = vst.msk [vmem:[%s180 + $0x640] sm:$0xff] %vm1238, %v622
        %1440 = vst.msk [vmem:[%s180 + $0x648] sm:$0xff] %vm1238, %v623
        %1441 = vst.msk [vmem:[%s180 + $0x650] sm:$0xff] %vm1238, %v624
        %1442 = vst.msk [vmem:[%s180 + $0x658] sm:$0xff] %vm1238, %v625
        %1443 = vst.msk [vmem:[%s180 + $0x660] sm:$0xff] %vm1238, %v626
        %1444 = vst.msk [vmem:[%s180 + $0x668] sm:$0xff] %vm1238, %v627
        %1445 = vst.msk [vmem:[%s180 + $0x670] sm:$0xff] %vm1238, %v628
        %1446 = vst.msk [vmem:[%s180 + $0x678] sm:$0xff] %vm1238, %v629
        %1447 = vst.msk [vmem:[%s180 + $0x680] sm:$0xff] %vm1238, %v646
        %1448 = vst.msk [vmem:[%s180 + $0x688] sm:$0xff] %vm1238, %v647
        %1449 = vst.msk [vmem:[%s180 + $0x690] sm:$0xff] %vm1238, %v648
        %1450 = vst.msk [vmem:[%s180 + $0x698] sm:$0xff] %vm1238, %v649
        %1451 = vst.msk [vmem:[%s180 + $0x6a0] sm:$0xff] %vm1238, %v650
        %1452 = vst.msk [vmem:[%s180 + $0x6a8] sm:$0xff] %vm1238, %v651
        %1453 = vst.msk [vmem:[%s180 + $0x6b0] sm:$0xff] %vm1238, %v652
        %1454 = vst.msk [vmem:[%s180 + $0x6b8] sm:$0xff] %vm1238, %v653
        %1455 = vst.msk [vmem:[%s180 + $0x6c0] sm:$0xff] %vm1238, %v654
        %1456 = vst.msk [vmem:[%s180 + $0x6c8] sm:$0xff] %vm1238, %v655
        %1457 = vst.msk [vmem:[%s180 + $0x6d0] sm:$0xff] %vm1238, %v656
        %1458 = vst.msk [vmem:[%s180 + $0x6d8] sm:$0xff] %vm1238, %v657
        %1459 = vst.msk [vmem:[%s180 + $0x6e0] sm:$0xff] %vm1238, %v658
        %1460 = vst.msk [vmem:[%s180 + $0x6e8] sm:$0xff] %vm1238, %v659
        %1461 = vst.msk [vmem:[%s180 + $0x6f0] sm:$0xff] %vm1238, %v660
        %1462 = vst.msk [vmem:[%s180 + $0x6f8] sm:$0xff] %vm1238, %v661
        %1463 = vst.msk [vmem:[%s180 + $0x700] sm:$0xff] %vm1238, %v678
        %1464 = vst.msk [vmem:[%s180 + $0x708] sm:$0xff] %vm1238, %v679
        %1465 = vst.msk [vmem:[%s180 + $0x710] sm:$0xff] %vm1238, %v680
        %1466 = vst.msk [vmem:[%s180 + $0x718] sm:$0xff] %vm1238, %v681
        %1467 = vst.msk [vmem:[%s180 + $0x720] sm:$0xff] %vm1238, %v682
        %1468 = vst.msk [vmem:[%s180 + $0x728] sm:$0xff] %vm1238, %v683
        %1469 = vst.msk [vmem:[%s180 + $0x730] sm:$0xff] %vm1238, %v684
        %1470 = vst.msk [vmem:[%s180 + $0x738] sm:$0xff] %vm1238, %v685
        %1471 = vst.msk [vmem:[%s180 + $0x740] sm:$0xff] %vm1238, %v686
        %1472 = vst.msk [vmem:[%s180 + $0x748] sm:$0xff] %vm1238, %v687
        %1473 = vst.msk [vmem:[%s180 + $0x750] sm:$0xff] %vm1238, %v688
        %1474 = vst.msk [vmem:[%s180 + $0x758] sm:$0xff] %vm1238, %v689
        %1475 = vst.msk [vmem:[%s180 + $0x760] sm:$0xff] %vm1238, %v690
        %1476 = vst.msk [vmem:[%s180 + $0x768] sm:$0xff] %vm1238, %v691
        %1477 = vst.msk [vmem:[%s180 + $0x770] sm:$0xff] %vm1238, %v692
        %1478 = vst.msk [vmem:[%s180 + $0x778] sm:$0xff] %vm1238, %v693
        %1479 = vst.msk [vmem:[%s180 + $0x780] sm:$0xff] %vm1238, %v710
        %1480 = vst.msk [vmem:[%s180 + $0x788] sm:$0xff] %vm1238, %v711
        %1481 = vst.msk [vmem:[%s180 + $0x790] sm:$0xff] %vm1238, %v712
        %1482 = vst.msk [vmem:[%s180 + $0x798] sm:$0xff] %vm1238, %v713
        %1483 = vst.msk [vmem:[%s180 + $0x7a0] sm:$0xff] %vm1238, %v714
        %1484 = vst.msk [vmem:[%s180 + $0x7a8] sm:$0xff] %vm1238, %v715
        %1485 = vst.msk [vmem:[%s180 + $0x7b0] sm:$0xff] %vm1238, %v716
        %1486 = vst.msk [vmem:[%s180 + $0x7b8] sm:$0xff] %vm1238, %v717
        %1487 = vst.msk [vmem:[%s180 + $0x7c0] sm:$0xff] %vm1238, %v718
        %1488 = vst.msk [vmem:[%s180 + $0x7c8] sm:$0xff] %vm1238, %v719
        %1489 = vst.msk [vmem:[%s180 + $0x7d0] sm:$0xff] %vm1238, %v720
        %1490 = vst.msk [vmem:[%s180 + $0x7d8] sm:$0xff] %vm1238, %v721
        %1491 = vst.msk [vmem:[%s180 + $0x7e0] sm:$0xff] %vm1238, %v722
        %1492 = vst.msk [vmem:[%s180 + $0x7e8] sm:$0xff] %vm1238, %v723
        %1493 = vst.msk [vmem:[%s180 + $0x7f0] sm:$0xff] %vm1238, %v724
        %1494 = vst.msk [vmem:[%s180 + $0x7f8] sm:$0xff] %vm1238, %v725
        %1495 = vst.msk [vmem:[%s180 + $0x800] sm:$0xff] %vm1238, %v742
        %1496 = vst.msk [vmem:[%s180 + $0x808] sm:$0xff] %vm1238, %v743
        %1497 = vst.msk [vmem:[%s180 + $0x810] sm:$0xff] %vm1238, %v744
        %1498 = vst.msk [vmem:[%s180 + $0x818] sm:$0xff] %vm1238, %v745
        %1499 = vst.msk [vmem:[%s180 + $0x820] sm:$0xff] %vm1238, %v746
        %1500 = vst.msk [vmem:[%s180 + $0x828] sm:$0xff] %vm1238, %v747
        %1501 = vst.msk [vmem:[%s180 + $0x830] sm:$0xff] %vm1238, %v748
        %1502 = vst.msk [vmem:[%s180 + $0x838] sm:$0xff] %vm1238, %v749
        %1503 = vst.msk [vmem:[%s180 + $0x840] sm:$0xff] %vm1238, %v750
        %1504 = vst.msk [vmem:[%s180 + $0x848] sm:$0xff] %vm1238, %v751
        %1505 = vst.msk [vmem:[%s180 + $0x850] sm:$0xff] %vm1238, %v752
        %1506 = vst.msk [vmem:[%s180 + $0x858] sm:$0xff] %vm1238, %v753
        %1507 = vst.msk [vmem:[%s180 + $0x860] sm:$0xff] %vm1238, %v754
        %1508 = vst.msk [vmem:[%s180 + $0x868] sm:$0xff] %vm1238, %v755
        %1509 = vst.msk [vmem:[%s180 + $0x870] sm:$0xff] %vm1238, %v756
        %1510 = vst.msk [vmem:[%s180 + $0x878] sm:$0xff] %vm1238, %v757
        %1511 = vst.msk [vmem:[%s180 + $0x880] sm:$0xff] %vm1238, %v774
        %1512 = vst.msk [vmem:[%s180 + $0x888] sm:$0xff] %vm1238, %v775
        %1513 = vst.msk [vmem:[%s180 + $0x890] sm:$0xff] %vm1238, %v776
        %1514 = vst.msk [vmem:[%s180 + $0x898] sm:$0xff] %vm1238, %v777
        %1515 = vst.msk [vmem:[%s180 + $0x8a0] sm:$0xff] %vm1238, %v778
        %1516 = vst.msk [vmem:[%s180 + $0x8a8] sm:$0xff] %vm1238, %v779
        %1517 = vst.msk [vmem:[%s180 + $0x8b0] sm:$0xff] %vm1238, %v780
        %1518 = vst.msk [vmem:[%s180 + $0x8b8] sm:$0xff] %vm1238, %v781
        %1519 = vst.msk [vmem:[%s180 + $0x8c0] sm:$0xff] %vm1238, %v782
        %1520 = vst.msk [vmem:[%s180 + $0x8c8] sm:$0xff] %vm1238, %v783
        %1521 = vst.msk [vmem:[%s180 + $0x8d0] sm:$0xff] %vm1238, %v784
        %1522 = vst.msk [vmem:[%s180 + $0x8d8] sm:$0xff] %vm1238, %v785
        %1523 = vst.msk [vmem:[%s180 + $0x8e0] sm:$0xff] %vm1238, %v786
        %1524 = vst.msk [vmem:[%s180 + $0x8e8] sm:$0xff] %vm1238, %v787
        %1525 = vst.msk [vmem:[%s180 + $0x8f0] sm:$0xff] %vm1238, %v788
        %1526 = vst.msk [vmem:[%s180 + $0x8f8] sm:$0xff] %vm1238, %v789
        %1527 = vst.msk [vmem:[%s180 + $0x900] sm:$0xff] %vm1238, %v806
        %1528 = vst.msk [vmem:[%s180 + $0x908] sm:$0xff] %vm1238, %v807
        %1529 = vst.msk [vmem:[%s180 + $0x910] sm:$0xff] %vm1238, %v808
        %1530 = vst.msk [vmem:[%s180 + $0x918] sm:$0xff] %vm1238, %v809
        %1531 = vst.msk [vmem:[%s180 + $0x920] sm:$0xff] %vm1238, %v810
        %1532 = vst.msk [vmem:[%s180 + $0x928] sm:$0xff] %vm1238, %v811
        %1533 = vst.msk [vmem:[%s180 + $0x930] sm:$0xff] %vm1238, %v812
        %1534 = vst.msk [vmem:[%s180 + $0x938] sm:$0xff] %vm1238, %v813
        %1535 = vst.msk [vmem:[%s180 + $0x940] sm:$0xff] %vm1238, %v814
        %1536 = vst.msk [vmem:[%s180 + $0x948] sm:$0xff] %vm1238, %v815
        %1537 = vst.msk [vmem:[%s180 + $0x950] sm:$0xff] %vm1238, %v816
        %1538 = vst.msk [vmem:[%s180 + $0x958] sm:$0xff] %vm1238, %v817
        %1539 = vst.msk [vmem:[%s180 + $0x960] sm:$0xff] %vm1238, %v818
        %1540 = vst.msk [vmem:[%s180 + $0x968] sm:$0xff] %vm1238, %v819
        %1541 = vst.msk [vmem:[%s180 + $0x970] sm:$0xff] %vm1238, %v820
        %1542 = vst.msk [vmem:[%s180 + $0x978] sm:$0xff] %vm1238, %v821
        %1543 = vst.msk [vmem:[%s180 + $0x980] sm:$0xff] %vm1238, %v838
        %1544 = vst.msk [vmem:[%s180 + $0x988] sm:$0xff] %vm1238, %v839
        %1545 = vst.msk [vmem:[%s180 + $0x990] sm:$0xff] %vm1238, %v840
        %1546 = vst.msk [vmem:[%s180 + $0x998] sm:$0xff] %vm1238, %v841
        %1547 = vst.msk [vmem:[%s180 + $0x9a0] sm:$0xff] %vm1238, %v842
        %1548 = vst.msk [vmem:[%s180 + $0x9a8] sm:$0xff] %vm1238, %v843
        %1549 = vst.msk [vmem:[%s180 + $0x9b0] sm:$0xff] %vm1238, %v844
        %1550 = vst.msk [vmem:[%s180 + $0x9b8] sm:$0xff] %vm1238, %v845
        %1551 = vst.msk [vmem:[%s180 + $0x9c0] sm:$0xff] %vm1238, %v846
        %1552 = vst.msk [vmem:[%s180 + $0x9c8] sm:$0xff] %vm1238, %v847
        %1553 = vst.msk [vmem:[%s180 + $0x9d0] sm:$0xff] %vm1238, %v848
        %1554 = vst.msk [vmem:[%s180 + $0x9d8] sm:$0xff] %vm1238, %v849
        %1555 = vst.msk [vmem:[%s180 + $0x9e0] sm:$0xff] %vm1238, %v850
        %1556 = vst.msk [vmem:[%s180 + $0x9e8] sm:$0xff] %vm1238, %v851
        %1557 = vst.msk [vmem:[%s180 + $0x9f0] sm:$0xff] %vm1238, %v852
        %1558 = vst.msk [vmem:[%s180 + $0x9f8] sm:$0xff] %vm1238, %v853
        %1559 = vst.msk [vmem:[%s180 + $0xa00] sm:$0xff] %vm1238, %v870
        %1560 = vst.msk [vmem:[%s180 + $0xa08] sm:$0xff] %vm1238, %v871
        %1561 = vst.msk [vmem:[%s180 + $0xa10] sm:$0xff] %vm1238, %v872
        %1562 = vst.msk [vmem:[%s180 + $0xa18] sm:$0xff] %vm1238, %v873
        %1563 = vst.msk [vmem:[%s180 + $0xa20] sm:$0xff] %vm1238, %v874
        %1564 = vst.msk [vmem:[%s180 + $0xa28] sm:$0xff] %vm1238, %v875
        %1565 = vst.msk [vmem:[%s180 + $0xa30] sm:$0xff] %vm1238, %v876
        %1566 = vst.msk [vmem:[%s180 + $0xa38] sm:$0xff] %vm1238, %v877
        %1567 = vst.msk [vmem:[%s180 + $0xa40] sm:$0xff] %vm1238, %v878
        %1568 = vst.msk [vmem:[%s180 + $0xa48] sm:$0xff] %vm1238, %v879
        %1569 = vst.msk [vmem:[%s180 + $0xa50] sm:$0xff] %vm1238, %v880
        %1570 = vst.msk [vmem:[%s180 + $0xa58] sm:$0xff] %vm1238, %v881
        %1571 = vst.msk [vmem:[%s180 + $0xa60] sm:$0xff] %vm1238, %v882
        %1572 = vst.msk [vmem:[%s180 + $0xa68] sm:$0xff] %vm1238, %v883
        %1573 = vst.msk [vmem:[%s180 + $0xa70] sm:$0xff] %vm1238, %v884
        %1574 = vst.msk [vmem:[%s180 + $0xa78] sm:$0xff] %vm1238, %v885
        %1575 = vst.msk [vmem:[%s180 + $0xa80] sm:$0xff] %vm1238, %v902
        %1576 = vst.msk [vmem:[%s180 + $0xa88] sm:$0xff] %vm1238, %v903
        %1577 = vst.msk [vmem:[%s180 + $0xa90] sm:$0xff] %vm1238, %v904
        %1578 = vst.msk [vmem:[%s180 + $0xa98] sm:$0xff] %vm1238, %v905
        %1579 = vst.msk [vmem:[%s180 + $0xaa0] sm:$0xff] %vm1238, %v906
        %1580 = vst.msk [vmem:[%s180 + $0xaa8] sm:$0xff] %vm1238, %v907
        %1581 = vst.msk [vmem:[%s180 + $0xab0] sm:$0xff] %vm1238, %v908
        %1582 = vst.msk [vmem:[%s180 + $0xab8] sm:$0xff] %vm1238, %v909
        %1583 = vst.msk [vmem:[%s180 + $0xac0] sm:$0xff] %vm1238, %v910
        %1584 = vst.msk [vmem:[%s180 + $0xac8] sm:$0xff] %vm1238, %v911
        %1585 = vst.msk [vmem:[%s180 + $0xad0] sm:$0xff] %vm1238, %v912
        %1586 = vst.msk [vmem:[%s180 + $0xad8] sm:$0xff] %vm1238, %v913
        %1587 = vst.msk [vmem:[%s180 + $0xae0] sm:$0xff] %vm1238, %v914
        %1588 = vst.msk [vmem:[%s180 + $0xae8] sm:$0xff] %vm1238, %v915
        %1589 = vst.msk [vmem:[%s180 + $0xaf0] sm:$0xff] %vm1238, %v916
        %1590 = vst.msk [vmem:[%s180 + $0xaf8] sm:$0xff] %vm1238, %v917
        %1591 = vst.msk [vmem:[%s180 + $0xb00] sm:$0xff] %vm1238, %v934
        %1592 = vst.msk [vmem:[%s180 + $0xb08] sm:$0xff] %vm1238, %v935
        %1593 = vst.msk [vmem:[%s180 + $0xb10] sm:$0xff] %vm1238, %v936
        %1594 = vst.msk [vmem:[%s180 + $0xb18] sm:$0xff] %vm1238, %v937
        %1595 = vst.msk [vmem:[%s180 + $0xb20] sm:$0xff] %vm1238, %v938
        %1596 = vst.msk [vmem:[%s180 + $0xb28] sm:$0xff] %vm1238, %v939
        %1597 = vst.msk [vmem:[%s180 + $0xb30] sm:$0xff] %vm1238, %v940
        %1598 = vst.msk [vmem:[%s180 + $0xb38] sm:$0xff] %vm1238, %v941
        %1599 = vst.msk [vmem:[%s180 + $0xb40] sm:$0xff] %vm1238, %v942
        %1600 = vst.msk [vmem:[%s180 + $0xb48] sm:$0xff] %vm1238, %v943
        %1601 = vst.msk [vmem:[%s180 + $0xb50] sm:$0xff] %vm1238, %v944
        %1602 = vst.msk [vmem:[%s180 + $0xb58] sm:$0xff] %vm1238, %v945
        %1603 = vst.msk [vmem:[%s180 + $0xb60] sm:$0xff] %vm1238, %v946
        %1604 = vst.msk [vmem:[%s180 + $0xb68] sm:$0xff] %vm1238, %v947
        %1605 = vst.msk [vmem:[%s180 + $0xb70] sm:$0xff] %vm1238, %v948
        %1606 = vst.msk [vmem:[%s180 + $0xb78] sm:$0xff] %vm1238, %v949
        %1607 = vst.msk [vmem:[%s180 + $0xb80] sm:$0xff] %vm1238, %v966
        %1608 = vst.msk [vmem:[%s180 + $0xb88] sm:$0xff] %vm1238, %v967
        %1609 = vst.msk [vmem:[%s180 + $0xb90] sm:$0xff] %vm1238, %v968
        %1610 = vst.msk [vmem:[%s180 + $0xb98] sm:$0xff] %vm1238, %v969
        %1611 = vst.msk [vmem:[%s180 + $0xba0] sm:$0xff] %vm1238, %v970
        %1612 = vst.msk [vmem:[%s180 + $0xba8] sm:$0xff] %vm1238, %v971
        %1613 = vst.msk [vmem:[%s180 + $0xbb0] sm:$0xff] %vm1238, %v972
        %1614 = vst.msk [vmem:[%s180 + $0xbb8] sm:$0xff] %vm1238, %v973
        %1615 = vst.msk [vmem:[%s180 + $0xbc0] sm:$0xff] %vm1238, %v974
        %1616 = vst.msk [vmem:[%s180 + $0xbc8] sm:$0xff] %vm1238, %v975
        %1617 = vst.msk [vmem:[%s180 + $0xbd0] sm:$0xff] %vm1238, %v976
        %1618 = vst.msk [vmem:[%s180 + $0xbd8] sm:$0xff] %vm1238, %v977
        %1619 = vst.msk [vmem:[%s180 + $0xbe0] sm:$0xff] %vm1238, %v978
        %1620 = vst.msk [vmem:[%s180 + $0xbe8] sm:$0xff] %vm1238, %v979
        %1621 = vst.msk [vmem:[%s180 + $0xbf0] sm:$0xff] %vm1238, %v980
        %1622 = vst.msk [vmem:[%s180 + $0xbf8] sm:$0xff] %vm1238, %v981
        %1623 = vst.msk [vmem:[%s180 + $0xc00] sm:$0xff] %vm1238, %v998
        %1624 = vst.msk [vmem:[%s180 + $0xc08] sm:$0xff] %vm1238, %v999
        %1625 = vst.msk [vmem:[%s180 + $0xc10] sm:$0xff] %vm1238, %v1000
        %1626 = vst.msk [vmem:[%s180 + $0xc18] sm:$0xff] %vm1238, %v1001
        %1627 = vst.msk [vmem:[%s180 + $0xc20] sm:$0xff] %vm1238, %v1002
        %1628 = vst.msk [vmem:[%s180 + $0xc28] sm:$0xff] %vm1238, %v1003
        %1629 = vst.msk [vmem:[%s180 + $0xc30] sm:$0xff] %vm1238, %v1004
        %1630 = vst.msk [vmem:[%s180 + $0xc38] sm:$0xff] %vm1238, %v1005
        %1631 = vst.msk [vmem:[%s180 + $0xc40] sm:$0xff] %vm1238, %v1006
        %1632 = vst.msk [vmem:[%s180 + $0xc48] sm:$0xff] %vm1238, %v1007
        %1633 = vst.msk [vmem:[%s180 + $0xc50] sm:$0xff] %vm1238, %v1008
        %1634 = vst.msk [vmem:[%s180 + $0xc58] sm:$0xff] %vm1238, %v1009
        %1635 = vst.msk [vmem:[%s180 + $0xc60] sm:$0xff] %vm1238, %v1010
        %1636 = vst.msk [vmem:[%s180 + $0xc68] sm:$0xff] %vm1238, %v1011
        %1637 = vst.msk [vmem:[%s180 + $0xc70] sm:$0xff] %vm1238, %v1012
        %1638 = vst.msk [vmem:[%s180 + $0xc78] sm:$0xff] %vm1238, %v1013
        %1639 = vst.msk [vmem:[%s180 + $0xc80] sm:$0xff] %vm1238, %v1030
        %1640 = vst.msk [vmem:[%s180 + $0xc88] sm:$0xff] %vm1238, %v1031
        %1641 = vst.msk [vmem:[%s180 + $0xc90] sm:$0xff] %vm1238, %v1032
        %1642 = vst.msk [vmem:[%s180 + $0xc98] sm:$0xff] %vm1238, %v1033
        %1643 = vst.msk [vmem:[%s180 + $0xca0] sm:$0xff] %vm1238, %v1034
        %1644 = vst.msk [vmem:[%s180 + $0xca8] sm:$0xff] %vm1238, %v1035
        %1645 = vst.msk [vmem:[%s180 + $0xcb0] sm:$0xff] %vm1238, %v1036
        %1646 = vst.msk [vmem:[%s180 + $0xcb8] sm:$0xff] %vm1238, %v1037
        %1647 = vst.msk [vmem:[%s180 + $0xcc0] sm:$0xff] %vm1238, %v1038
        %1648 = vst.msk [vmem:[%s180 + $0xcc8] sm:$0xff] %vm1238, %v1039
        %1649 = vst.msk [vmem:[%s180 + $0xcd0] sm:$0xff] %vm1238, %v1040
        %1650 = vst.msk [vmem:[%s180 + $0xcd8] sm:$0xff] %vm1238, %v1041
        %1651 = vst.msk [vmem:[%s180 + $0xce0] sm:$0xff] %vm1238, %v1042
        %1652 = vst.msk [vmem:[%s180 + $0xce8] sm:$0xff] %vm1238, %v1043
        %1653 = vst.msk [vmem:[%s180 + $0xcf0] sm:$0xff] %vm1238, %v1044
        %1654 = vst.msk [vmem:[%s180 + $0xcf8] sm:$0xff] %vm1238, %v1045
        %1655 = vst.msk [vmem:[%s180 + $0xd00] sm:$0xff] %vm1238, %v1062
        %1656 = vst.msk [vmem:[%s180 + $0xd08] sm:$0xff] %vm1238, %v1063
        %1657 = vst.msk [vmem:[%s180 + $0xd10] sm:$0xff] %vm1238, %v1064
        %1658 = vst.msk [vmem:[%s180 + $0xd18] sm:$0xff] %vm1238, %v1065
        %1659 = vst.msk [vmem:[%s180 + $0xd20] sm:$0xff] %vm1238, %v1066
        %1660 = vst.msk [vmem:[%s180 + $0xd28] sm:$0xff] %vm1238, %v1067
        %1661 = vst.msk [vmem:[%s180 + $0xd30] sm:$0xff] %vm1238, %v1068
        %1662 = vst.msk [vmem:[%s180 + $0xd38] sm:$0xff] %vm1238, %v1069
        %1663 = vst.msk [vmem:[%s180 + $0xd40] sm:$0xff] %vm1238, %v1070
        %1664 = vst.msk [vmem:[%s180 + $0xd48] sm:$0xff] %vm1238, %v1071
        %1665 = vst.msk [vmem:[%s180 + $0xd50] sm:$0xff] %vm1238, %v1072
        %1666 = vst.msk [vmem:[%s180 + $0xd58] sm:$0xff] %vm1238, %v1073
        %1667 = vst.msk [vmem:[%s180 + $0xd60] sm:$0xff] %vm1238, %v1074
        %1668 = vst.msk [vmem:[%s180 + $0xd68] sm:$0xff] %vm1238, %v1075
        %1669 = vst.msk [vmem:[%s180 + $0xd70] sm:$0xff] %vm1238, %v1076
        %1670 = vst.msk [vmem:[%s180 + $0xd78] sm:$0xff] %vm1238, %v1077
        %1671 = vst.msk [vmem:[%s180 + $0xd80] sm:$0xff] %vm1238, %v1094
        %1672 = vst.msk [vmem:[%s180 + $0xd88] sm:$0xff] %vm1238, %v1095
        %1673 = vst.msk [vmem:[%s180 + $0xd90] sm:$0xff] %vm1238, %v1096
        %1674 = vst.msk [vmem:[%s180 + $0xd98] sm:$0xff] %vm1238, %v1097
        %1675 = vst.msk [vmem:[%s180 + $0xda0] sm:$0xff] %vm1238, %v1098
        %1676 = vst.msk [vmem:[%s180 + $0xda8] sm:$0xff] %vm1238, %v1099
        %1677 = vst.msk [vmem:[%s180 + $0xdb0] sm:$0xff] %vm1238, %v1100
        %1678 = vst.msk [vmem:[%s180 + $0xdb8] sm:$0xff] %vm1238, %v1101
        %1679 = vst.msk [vmem:[%s180 + $0xdc0] sm:$0xff] %vm1238, %v1102
        %1680 = vst.msk [vmem:[%s180 + $0xdc8] sm:$0xff] %vm1238, %v1103
        %1681 = vst.msk [vmem:[%s180 + $0xdd0] sm:$0xff] %vm1238, %v1104
        %1682 = vst.msk [vmem:[%s180 + $0xdd8] sm:$0xff] %vm1238, %v1105
        %1683 = vst.msk [vmem:[%s180 + $0xde0] sm:$0xff] %vm1238, %v1106
        %1684 = vst.msk [vmem:[%s180 + $0xde8] sm:$0xff] %vm1238, %v1107
        %1685 = vst.msk [vmem:[%s180 + $0xdf0] sm:$0xff] %vm1238, %v1108
        %1686 = vst.msk [vmem:[%s180 + $0xdf8] sm:$0xff] %vm1238, %v1109
        %1687 = vst.msk [vmem:[%s180 + $0xe00] sm:$0xff] %vm1238, %v1126
        %1688 = vst.msk [vmem:[%s180 + $0xe08] sm:$0xff] %vm1238, %v1127
        %1689 = vst.msk [vmem:[%s180 + $0xe10] sm:$0xff] %vm1238, %v1128
        %1690 = vst.msk [vmem:[%s180 + $0xe18] sm:$0xff] %vm1238, %v1129
        %1691 = vst.msk [vmem:[%s180 + $0xe20] sm:$0xff] %vm1238, %v1130
        %1692 = vst.msk [vmem:[%s180 + $0xe28] sm:$0xff] %vm1238, %v1131
        %1693 = vst.msk [vmem:[%s180 + $0xe30] sm:$0xff] %vm1238, %v1132
        %1694 = vst.msk [vmem:[%s180 + $0xe38] sm:$0xff] %vm1238, %v1133
        %1695 = vst.msk [vmem:[%s180 + $0xe40] sm:$0xff] %vm1238, %v1134
        %1696 = vst.msk [vmem:[%s180 + $0xe48] sm:$0xff] %vm1238, %v1135
        %1697 = vst.msk [vmem:[%s180 + $0xe50] sm:$0xff] %vm1238, %v1136
        %1698 = vst.msk [vmem:[%s180 + $0xe58] sm:$0xff] %vm1238, %v1137
        %1699 = vst.msk [vmem:[%s180 + $0xe60] sm:$0xff] %vm1238, %v1138
        %1700 = vst.msk [vmem:[%s180 + $0xe68] sm:$0xff] %vm1238, %v1139
        %1701 = vst.msk [vmem:[%s180 + $0xe70] sm:$0xff] %vm1238, %v1140
        %1702 = vst.msk [vmem:[%s180 + $0xe78] sm:$0xff] %vm1238, %v1141
        %1703 = vst.msk [vmem:[%s180 + $0xe80] sm:$0xff] %vm1238, %v1158
        %1704 = vst.msk [vmem:[%s180 + $0xe88] sm:$0xff] %vm1238, %v1159
        %1705 = vst.msk [vmem:[%s180 + $0xe90] sm:$0xff] %vm1238, %v1160
        %1706 = vst.msk [vmem:[%s180 + $0xe98] sm:$0xff] %vm1238, %v1161
        %1707 = vst.msk [vmem:[%s180 + $0xea0] sm:$0xff] %vm1238, %v1162
        %1708 = vst.msk [vmem:[%s180 + $0xea8] sm:$0xff] %vm1238, %v1163
        %1709 = vst.msk [vmem:[%s180 + $0xeb0] sm:$0xff] %vm1238, %v1164
        %1710 = vst.msk [vmem:[%s180 + $0xeb8] sm:$0xff] %vm1238, %v1165
        %1711 = vst.msk [vmem:[%s180 + $0xec0] sm:$0xff] %vm1238, %v1166
        %1712 = vst.msk [vmem:[%s180 + $0xec8] sm:$0xff] %vm1238, %v1167
        %1713 = vst.msk [vmem:[%s180 + $0xed0] sm:$0xff] %vm1238, %v1168
        %1714 = vst.msk [vmem:[%s180 + $0xed8] sm:$0xff] %vm1238, %v1169
        %1715 = vst.msk [vmem:[%s180 + $0xee0] sm:$0xff] %vm1238, %v1170
        %1716 = vst.msk [vmem:[%s180 + $0xee8] sm:$0xff] %vm1238, %v1171
        %1717 = vst.msk [vmem:[%s180 + $0xef0] sm:$0xff] %vm1238, %v1172
        %1718 = vst.msk [vmem:[%s180 + $0xef8] sm:$0xff] %vm1238, %v1173
        %1719 = vst.msk [vmem:[%s180 + $0xf00] sm:$0xff] %vm1238, %v1190
        %1720 = vst.msk [vmem:[%s180 + $0xf08] sm:$0xff] %vm1238, %v1191
        %1721 = vst.msk [vmem:[%s180 + $0xf10] sm:$0xff] %vm1238, %v1192
        %1722 = vst.msk [vmem:[%s180 + $0xf18] sm:$0xff] %vm1238, %v1193
        %1723 = vst.msk [vmem:[%s180 + $0xf20] sm:$0xff] %vm1238, %v1194
        %1724 = vst.msk [vmem:[%s180 + $0xf28] sm:$0xff] %vm1238, %v1195
        %1725 = vst.msk [vmem:[%s180 + $0xf30] sm:$0xff] %vm1238, %v1196
        %1726 = vst.msk [vmem:[%s180 + $0xf38] sm:$0xff] %vm1238, %v1197
        %1727 = vst.msk [vmem:[%s180 + $0xf40] sm:$0xff] %vm1238, %v1198
        %1728 = vst.msk [vmem:[%s180 + $0xf48] sm:$0xff] %vm1238, %v1199
        %1729 = vst.msk [vmem:[%s180 + $0xf50] sm:$0xff] %vm1238, %v1200
        %1730 = vst.msk [vmem:[%s180 + $0xf58] sm:$0xff] %vm1238, %v1201
        %1731 = vst.msk [vmem:[%s180 + $0xf60] sm:$0xff] %vm1238, %v1202
        %1732 = vst.msk [vmem:[%s180 + $0xf68] sm:$0xff] %vm1238, %v1203
        %1733 = vst.msk [vmem:[%s180 + $0xf70] sm:$0xff] %vm1238, %v1204
        %1734 = vst.msk [vmem:[%s180 + $0xf78] sm:$0xff] %vm1238, %v1205
        %1735 = vst.msk [vmem:[%s180 + $0xf80] sm:$0xff] %vm1238, %v1222
        %1736 = vst.msk [vmem:[%s180 + $0xf88] sm:$0xff] %vm1238, %v1223
        %1737 = vst.msk [vmem:[%s180 + $0xf90] sm:$0xff] %vm1238, %v1224
        %1738 = vst.msk [vmem:[%s180 + $0xf98] sm:$0xff] %vm1238, %v1225
        %1739 = vst.msk [vmem:[%s180 + $0xfa0] sm:$0xff] %vm1238, %v1226
        %1740 = vst.msk [vmem:[%s180 + $0xfa8] sm:$0xff] %vm1238, %v1227
        %1741 = vst.msk [vmem:[%s180 + $0xfb0] sm:$0xff] %vm1238, %v1228
        %1742 = vst.msk [vmem:[%s180 + $0xfb8] sm:$0xff] %vm1238, %v1229
        %1743 = vst.msk [vmem:[%s180 + $0xfc0] sm:$0xff] %vm1238, %v1230
        %1744 = vst.msk [vmem:[%s180 + $0xfc8] sm:$0xff] %vm1238, %v1231
        %1745 = vst.msk [vmem:[%s180 + $0xfd0] sm:$0xff] %vm1238, %v1232
        %1746 = vst.msk [vmem:[%s180 + $0xfd8] sm:$0xff] %vm1238, %v1233
        %1747 = vst.msk [vmem:[%s180 + $0xfe0] sm:$0xff] %vm1238, %v1234
        %1748 = vst.msk [vmem:[%s180 + $0xfe8] sm:$0xff] %vm1238, %v1235
        %1749 = vst.msk [vmem:[%s180 + $0xff0] sm:$0xff] %vm1238, %v1236
        %1750 = vst.msk [vmem:[%s180 + $0xff8] sm:$0xff] %vm1238, %v1237
        %s1751 = smul.u32 512, %s22
        %p1752 = scmp.lt.s32.totalorder %s20, 3
        %s1753 = scalar_select %p1752, %s20, 3
        %p1754 = scmp.lt.s32.totalorder %s1751, 511
        %s1755 = scalar_select %p1754, %s1751, 511
        %p1756 = scmp.lt.s32.totalorder %s21, 0
        %s1757 = scalar_select %p1756, %s21, 0
        %s1758 = sadd.s32 %s1757, %s1755
        %s1759 = smul.addr %s1753, 512
        %s1760 = sadd.s32 %s1758, %s1759
        %s1761 = smul.addr %s1760, 8
        %s1762 = scalar_lea.vmem %s1, %s1761
        // Predicated region
        $region29: #{tpu_custom_call.1} parent=23 // pred_check
          %p1763 = pneg %p86
        $region30: #{tpu_custom_call.1} parent=23 // pred_check_branch
          %1765 = sbr.rel (%p1763) target = $region32
        $region31: #{tpu_custom_call.1} parent=23 // pred_region
          %s1766 = smul.u32 512, %s22
        $region32: #{tpu_custom_call.1} parent=23 // pred_fallthru
          _
      $region24: #{tpu_custom_call.1} parent=5 // pred_fallthru
        _
      %p1767 = scmp.le.s32.totalorder 2, %s10
      // Predicated region
      $region33: #{tpu_custom_call.1} parent=5 // pred_check
        %p1768 = pneg %p1767
      $region34: #{tpu_custom_call.1} parent=5 // pred_check_branch
        %1770 = sbr.rel (%p1768) target = $region36
      $region35: #{tpu_custom_call.1} parent=5 // pred_region
        %s1771 = ssub.s32 %s10, 2
        // Predicated region
        $region37: #{tpu_custom_call.1} parent=35 // pred_check
          %p1772 = pneg %p92
        $region38: #{tpu_custom_call.1} parent=35 // pred_check_branch
          %1774 = sbr.rel (%p1772) target = $region40
        $region39: #{tpu_custom_call.1} parent=35 // pred_region
          %s1775 = smul.u32 512, %s25
          %p1776 = scmp.lt.s32.totalorder %s23, 3
          %s1777 = scalar_select %p1776, %s23, 3
          %p1778 = scmp.lt.s32.totalorder %s1775, 511
          %s1779 = scalar_select %p1778, %s1775, 511
          %p1780 = scmp.lt.s32.totalorder %s24, 0
          %s1781 = scalar_select %p1780, %s24, 0
          %s1782 = sadd.s32 %s1781, %s1779
          %s1783 = smul.addr %s1777, 512
          %s1784 = sadd.s32 %s1782, %s1783
          %s1785 = smul.addr %s1784, 8
          %s1786 = scalar_lea.vmem %s1, %s1785
        $region40: #{tpu_custom_call.1} parent=35 // pred_fallthru
          _
      $region36: #{tpu_custom_call.1} parent=5 // pred_fallthru
        _
    $region6: #{tpu_custom_call.1} parent=1 // loop_footer
      %s14 = sadd.s32 1, %s10
    $region7: #{tpu_custom_call.1} parent=1 // loop_footer_branch
      %9 = sbr.rel target = $region3
    $region8: #{tpu_custom_call.1} parent=1 // loop_exit
      _
    %1787 = vsyncpa [#allocation3], 1
    %s1788 = scalar_lea.sflag [#allocation3], 1
    %1789 = vsyncpa %s1788, 1

</llo_original>
